<compile_context>
chip_gen: v6e
topology: v6e:2x2x1
jax: 0.10.0
libtpu: 0.0.40
codegen_flags: <defaults>
</compile_context>

<pallas_src>
import math

import jax
import jax.numpy as jnp
from jax import lax
from jax.experimental import pallas as pl
from jax.experimental.pallas import tpu as pltpu


# ---------------------------------------------------------------------------
# Fused forward kernel (one grid step = one batch element)
# ---------------------------------------------------------------------------
def geminn_forward(x, params):
    B, k, C, H, W = x.shape
    HW = H * W
    Cc = params["w_conv"].shape[0]
    L = params["w_fc1"].shape[0]
    O = params["w_fc3"].shape[0]
    f32 = jnp.float32

    # ---- im2col in plain-JAX glue (single pass over the input) ----
    # pat[b, tap*C + c, i*HW + h*W + w] = x_pad[b, i, c, h+dy, w+dx], tap=dy*3+dx
    xp = jnp.pad(x, ((0, 0), (0, 0), (0, 0), (1, 1), (1, 1)))
    taps = [xp[:, :, :, dy:dy + H, dx:dx + W]
            for dy in range(3) for dx in range(3)]
    pat = jnp.stack(taps, axis=2)                       # (B, k, 9, C, H, W)
    pat = jnp.transpose(pat, (0, 2, 3, 1, 4, 5))        # (B, 9, C, k, H, W)
    pat = pat.reshape(B, 9 * C, k * HW).astype(f32)     # (B, 9C, k*HW)

    # Per-image spatial mean-pool expressed as a matmul: pool[i, i*HW+j] = 1/HW
    pool = (jnp.repeat(jnp.eye(k, dtype=f32), HW, axis=1) / HW)   # (k, k*HW)

    def kernel(pat_ref, pool_ref, wc_ref, bc_ref, wcf_ref, bcf_ref,
               w1_ref, b1_ref, w1f_ref, b1f_ref,
               w2_ref, b2_ref, w3_ref, b3_ref, o_ref):
        patches = pat_ref[0]                                       # (9C, k*HW)

        # -- equivariant ConvBlock (3x3 conv + bias + ReLU), all k images in
        #    one MXU matmul; accumulator is lane-dense (Cout on sublanes).
        acc_e = jnp.dot(wc_ref[...], patches, preferred_element_type=f32)
        acc_e = jnp.maximum(acc_e + bc_ref[...], 0.0)              # (Cc, k*HW)

        # -- invariant (fusion) ConvBlock on the mean image
        #    (mean over k of patches == patches of the mean image).
        fused = patches[:, 0:HW]
        for i in range(1, k):
            fused = fused + patches[:, i * HW:(i + 1) * HW]
        fused = fused * (1.0 / k)                                  # (9C, HW)
        acc_f = jnp.dot(wcf_ref[...], fused, preferred_element_type=f32)
        acc_f = jnp.maximum(acc_f + bcf_ref[...], 0.0)             # (Cc, HW)
        pf = jnp.mean(acc_f, axis=1, keepdims=True)                # (Cc, 1)

        # -- per-image spatial mean-pool (matmul vs. pooling matrix) + fusion
        pe = lax.dot_general(acc_e, pool_ref[...],
                             (((1,), (1,)), ((), ())),
                             preferred_element_type=f32)           # (Cc, k)
        v = pe + pf                                                # (Cc, k)

        # -- GEMILayer_V1: relu(fc1(v_i) + fc1_fusion(mean_i v_i));
        #    fusion matmul done once per batch element (not k times).
        vmean = jnp.mean(v, axis=1, keepdims=True)                 # (Cc, 1)
        h = jnp.dot(w1_ref[...], v, preferred_element_type=f32) + b1_ref[...]
        g = jnp.dot(w1f_ref[...], vmean, preferred_element_type=f32) + b1f_ref[...]
        u = jnp.maximum(h + g, 0.0)                                # (L, k)

        # -- head: sum over k images, relu(fc2), fc3
        s = jnp.sum(u, axis=1, keepdims=True)                      # (L, 1)
        h2 = jnp.maximum(
            jnp.dot(w2_ref[...], s, preferred_element_type=f32) + b2_ref[...],
            0.0)                                                   # (L, 1)
        o_ref[0] = (jnp.dot(w3_ref[...], h2, preferred_element_type=f32)
                    + b3_ref[...])                                 # (O, 1)

    def full(shape):
        return pl.BlockSpec(shape, lambda b, _s=shape: (0,) * len(_s))

    out = pl.pallas_call(
        kernel,
        out_shape=jax.ShapeDtypeStruct((B, O, 1), f32),
        grid=(B,),
        in_specs=[
            pl.BlockSpec((1, 9 * C, k * HW), lambda b: (b, 0, 0)),  # patches
            full((k, k * HW)),                                      # pooling matrix
            full((Cc, 9 * C)), full((Cc, 1)),                       # conv
            full((Cc, 9 * C)), full((Cc, 1)),                       # conv fusion
            full((L, Cc)), full((L, 1)),                            # fc1
            full((L, Cc)), full((L, 1)),                            # fc1 fusion
            full((L, L)), full((L, 1)),                             # fc2
            full((O, L)), full((O, 1)),                             # fc3
        ],
        out_specs=pl.BlockSpec((1, O, 1), lambda b: (b, 0, 0)),
        compiler_params=pltpu.CompilerParams(
            dimension_semantics=("parallel",)),                     # v7x: 2 TCs
    )(pat, pool,
      params["w_conv"], params["b_conv"],
      params["w_convf"], params["b_convf"],
      params["w_fc1"], params["b_fc1"],
      params["w_fc1f"], params["b_fc1f"],
      params["w_fc2"], params["b_fc2"],
      params["w_fc3"], params["b_fc3"])
    return out[:, :, 0]                                             # (B, O)


# ---------------------------------------------------------------------------
# Parameters (deterministic init, PyTorch-style uniform(+-1/sqrt(fan_in)))
# Weights stored (out_features, in_features); biases as column vectors.
# ---------------------------------------------------------------------------
def init_params(key, in_ch, conv_ch, lin_ch, num_classes):
    keys = jax.random.split(key, 12)

    def u(kk, shape, fan_in):
        bound = 1.0 / math.sqrt(fan_in)
        return jax.random.uniform(kk, shape, jnp.float32, -bound, bound)

    p = {}
    p["w_conv"]  = u(keys[0],  (conv_ch, 9 * in_ch),    in_ch * 9)  # ConvBlock
    p["b_conv"]  = u(keys[1],  (conv_ch, 1),            in_ch * 9)
    p["w_convf"] = u(keys[2],  (conv_ch, 9 * in_ch),    in_ch * 9)  # ConvBlock fusion
    p["b_convf"] = u(keys[3],  (conv_ch, 1),            in_ch * 9)
    p["w_fc1"]   = u(keys[4],  (lin_ch, conv_ch),       conv_ch)
    p["b_fc1"]   = u(keys[5],  (lin_ch, 1),             conv_ch)
    p["w_fc1f"]  = u(keys[6],  (lin_ch, conv_ch),       conv_ch)
    p["b_fc1f"]  = u(keys[7],  (lin_ch, 1),             conv_ch)
    p["w_fc2"]   = u(keys[8],  (lin_ch, lin_ch),        lin_ch)
    p["b_fc2"]   = u(keys[9],  (lin_ch, 1),             lin_ch)
    p["w_fc3"]   = u(keys[10], (num_classes, lin_ch),   lin_ch)     # type='classify'
    p["b_fc3"]   = u(keys[11], (num_classes, 1),        lin_ch)
    return p


if __name__ == "__main__":
    B, k, C, H, W = 2, 3, 4, 16, 16
    conv_ch, lin_ch, num_classes = 32, 32, 10   # args.conv_channels / args.lin_channels

    key = jax.random.PRNGKey(0)
    kx, kp = jax.random.split(key)
    x = jax.random.normal(kx, (B, k, C, H, W), jnp.float32)
    params = init_params(kp, C, conv_ch, lin_ch, num_classes)

    out = jax.jit(geminn_forward)(x, params)
    out = jax.block_until_ready(out)
    assert out.shape == (B, num_classes), out.shape
    print("KERNEL_OK")
</pallas_src>

<mosaic_0001>
module attributes {stable_mosaic.version = 11 : i64} {
  func.func @kernel(%arg0: i32, %arg1: memref<1x36x768xf32, #tpu.memory_space<vmem>>, %arg2: memref<3x768xf32, #tpu.memory_space<vmem>>, %arg3: memref<32x36xf32, #tpu.memory_space<vmem>>, %arg4: memref<32x1xf32, #tpu.memory_space<vmem>>, %arg5: memref<32x36xf32, #tpu.memory_space<vmem>>, %arg6: memref<32x1xf32, #tpu.memory_space<vmem>>, %arg7: memref<32x32xf32, #tpu.memory_space<vmem>>, %arg8: memref<32x1xf32, #tpu.memory_space<vmem>>, %arg9: memref<32x32xf32, #tpu.memory_space<vmem>>, %arg10: memref<32x1xf32, #tpu.memory_space<vmem>>, %arg11: memref<32x32xf32, #tpu.memory_space<vmem>>, %arg12: memref<32x1xf32, #tpu.memory_space<vmem>>, %arg13: memref<10x32xf32, #tpu.memory_space<vmem>>, %arg14: memref<10x1xf32, #tpu.memory_space<vmem>>, %arg15: memref<1x10x1xf32, #tpu.memory_space<vmem>>) attributes {dimension_semantics = [#tpu.dimension_semantics<parallel>], iteration_bounds = array<i64: 2>, scalar_prefetch = 0 : i64, scratch_operands = 0 : i64, tpu.core_type = #tpu.core_type<tc>, window_params = [{transform_indices = @transform_0, window_bounds = array<i64: 1, 36, 768>}, {pipeline_mode = #tpu.pipeline_mode<synchronous>, transform_indices = @transform_1, window_bounds = array<i64: 3, 768>}, {pipeline_mode = #tpu.pipeline_mode<synchronous>, transform_indices = @transform_2, window_bounds = array<i64: 32, 36>}, {pipeline_mode = #tpu.pipeline_mode<synchronous>, transform_indices = @transform_3, window_bounds = array<i64: 32, 1>}, {pipeline_mode = #tpu.pipeline_mode<synchronous>, transform_indices = @transform_4, window_bounds = array<i64: 32, 36>}, {pipeline_mode = #tpu.pipeline_mode<synchronous>, transform_indices = @transform_5, window_bounds = array<i64: 32, 1>}, {pipeline_mode = #tpu.pipeline_mode<synchronous>, transform_indices = @transform_6, window_bounds = array<i64: 32, 32>}, {pipeline_mode = #tpu.pipeline_mode<synchronous>, transform_indices = @transform_7, window_bounds = array<i64: 32, 1>}, {pipeline_mode = #tpu.pipeline_mode<synchronous>, transform_indices = @transform_8, window_bounds = array<i64: 32, 32>}, {pipeline_mode = #tpu.pipeline_mode<synchronous>, transform_indices = @transform_9, window_bounds = array<i64: 32, 1>}, {pipeline_mode = #tpu.pipeline_mode<synchronous>, transform_indices = @transform_10, window_bounds = array<i64: 32, 32>}, {pipeline_mode = #tpu.pipeline_mode<synchronous>, transform_indices = @transform_11, window_bounds = array<i64: 32, 1>}, {pipeline_mode = #tpu.pipeline_mode<synchronous>, transform_indices = @transform_12, window_bounds = array<i64: 10, 32>}, {pipeline_mode = #tpu.pipeline_mode<synchronous>, transform_indices = @transform_13, window_bounds = array<i64: 10, 1>}, {transform_indices = @transform_14, window_bounds = array<i64: 1, 10, 1>}]} {
    %c0 = arith.constant 0 : index
    %c0_0 = arith.constant 0 : index
    %c0_1 = arith.constant 0 : index
    %0 = vector.load %arg1[%c0, %c0_0, %c0_1] : memref<1x36x768xf32, #tpu.memory_space<vmem>>, vector<1x36x768xf32>
    %1 = vector.shape_cast %0 : vector<1x36x768xf32> to vector<36x768xf32>
    %c0_2 = arith.constant 0 : index
    %c0_3 = arith.constant 0 : index
    %2 = vector.load %arg3[%c0_2, %c0_3] : memref<32x36xf32, #tpu.memory_space<vmem>>, vector<32x36xf32>
    %cst = arith.constant dense<0.000000e+00> : vector<32x768xf32>
    %3 = tpu.matmul %2, %1, %cst {dimension_numbers = #tpu.dot_dimension_numbers<[1], [0], [0], [1], [0, 0, 1, 1], [], []>} : vector<32x36xf32>, vector<36x768xf32>, vector<32x768xf32> -> vector<32x768xf32>
    %c0_4 = arith.constant 0 : index
    %c0_5 = arith.constant 0 : index
    %4 = vector.load %arg4[%c0_4, %c0_5] : memref<32x1xf32, #tpu.memory_space<vmem>>, vector<32x1xf32>
    %5 = vector.broadcast %4 : vector<32x1xf32> to vector<32x768xf32>
    %6 = arith.addf %3, %5 : vector<32x768xf32>
    %cst_6 = arith.constant 0.000000e+00 : f32
    %7 = vector.broadcast %cst_6 : f32 to vector<32x768xf32>
    %8 = arith.maximumf %6, %7 : vector<32x768xf32>
    %9 = vector.extract_strided_slice %1 {offsets = [0, 0], sizes = [36, 256], strides = [1, 1]} : vector<36x768xf32> to vector<36x256xf32>
    %10 = vector.extract_strided_slice %1 {offsets = [0, 256], sizes = [36, 256], strides = [1, 1]} : vector<36x768xf32> to vector<36x256xf32>
    %11 = arith.addf %9, %10 : vector<36x256xf32>
    %12 = vector.extract_strided_slice %1 {offsets = [0, 512], sizes = [36, 256], strides = [1, 1]} : vector<36x768xf32> to vector<36x256xf32>
    %13 = arith.addf %11, %12 : vector<36x256xf32>
    %cst_7 = arith.constant 0.333333343 : f32
    %14 = vector.broadcast %cst_7 : f32 to vector<36x256xf32>
    %15 = arith.mulf %13, %14 : vector<36x256xf32>
    %c0_8 = arith.constant 0 : index
    %c0_9 = arith.constant 0 : index
    %16 = vector.load %arg5[%c0_8, %c0_9] : memref<32x36xf32, #tpu.memory_space<vmem>>, vector<32x36xf32>
    %cst_10 = arith.constant dense<0.000000e+00> : vector<32x256xf32>
    %17 = tpu.matmul %16, %15, %cst_10 {dimension_numbers = #tpu.dot_dimension_numbers<[1], [0], [0], [1], [0, 0, 1, 1], [], []>} : vector<32x36xf32>, vector<36x256xf32>, vector<32x256xf32> -> vector<32x256xf32>
    %c0_11 = arith.constant 0 : index
    %c0_12 = arith.constant 0 : index
    %18 = vector.load %arg6[%c0_11, %c0_12] : memref<32x1xf32, #tpu.memory_space<vmem>>, vector<32x1xf32>
    %19 = vector.broadcast %18 : vector<32x1xf32> to vector<32x256xf32>
    %20 = arith.addf %17, %19 : vector<32x256xf32>
    %cst_13 = arith.constant 0.000000e+00 : f32
    %21 = vector.broadcast %cst_13 : f32 to vector<32x256xf32>
    %22 = arith.maximumf %20, %21 : vector<32x256xf32>
    %cst_14 = arith.constant dense<0.000000e+00> : vector<32xf32>
    %23 = vector.multi_reduction <add>, %22, %cst_14 [1] : vector<32x256xf32> to vector<32xf32>
    %24 = vector.shape_cast %23 : vector<32xf32> to vector<32x1xf32>
    %cst_15 = arith.constant 2.560000e+02 : f32
    %25 = vector.broadcast %cst_15 : f32 to vector<32x1xf32>
    %26 = arith.divf %24, %25 : vector<32x1xf32>
    %c0_16 = arith.constant 0 : index
    %c0_17 = arith.constant 0 : index
    %27 = vector.load %arg2[%c0_16, %c0_17] : memref<3x768xf32, #tpu.memory_space<vmem>>, vector<3x768xf32>
    %cst_18 = arith.constant dense<0.000000e+00> : vector<32x3xf32>
    %28 = tpu.matmul %8, %27, %cst_18 {dimension_numbers = #tpu.dot_dimension_numbers<[1], [1], [0], [0], [0, 0, 1, 0], [], []>} : vector<32x768xf32>, vector<3x768xf32>, vector<32x3xf32> -> vector<32x3xf32>
    %29 = vector.broadcast %26 : vector<32x1xf32> to vector<32x3xf32>
    %30 = arith.addf %28, %29 : vector<32x3xf32>
    %cst_19 = arith.constant dense<0.000000e+00> : vector<32xf32>
    %31 = vector.multi_reduction <add>, %30, %cst_19 [1] : vector<32x3xf32> to vector<32xf32>
    %32 = vector.shape_cast %31 : vector<32xf32> to vector<32x1xf32>
    %cst_20 = arith.constant 3.000000e+00 : f32
    %33 = vector.broadcast %cst_20 : f32 to vector<32x1xf32>
    %34 = arith.divf %32, %33 : vector<32x1xf32>
    %c0_21 = arith.constant 0 : index
    %c0_22 = arith.constant 0 : index
    %35 = vector.load %arg7[%c0_21, %c0_22] : memref<32x32xf32, #tpu.memory_space<vmem>>, vector<32x32xf32>
    %cst_23 = arith.constant dense<0.000000e+00> : vector<32x3xf32>
    %36 = tpu.matmul %35, %30, %cst_23 {dimension_numbers = #tpu.dot_dimension_numbers<[1], [0], [0], [1], [0, 0, 1, 1], [], []>} : vector<32x32xf32>, vector<32x3xf32>, vector<32x3xf32> -> vector<32x3xf32>
    %c0_24 = arith.constant 0 : index
    %c0_25 = arith.constant 0 : index
    %37 = vector.load %arg8[%c0_24, %c0_25] : memref<32x1xf32, #tpu.memory_space<vmem>>, vector<32x1xf32>
    %38 = vector.broadcast %37 : vector<32x1xf32> to vector<32x3xf32>
    %39 = arith.addf %36, %38 : vector<32x3xf32>
    %c0_26 = arith.constant 0 : index
    %c0_27 = arith.constant 0 : index
    %40 = vector.load %arg9[%c0_26, %c0_27] : memref<32x32xf32, #tpu.memory_space<vmem>>, vector<32x32xf32>
    %cst_28 = arith.constant dense<0.000000e+00> : vector<32x1xf32>
    %41 = tpu.matmul %40, %34, %cst_28 {dimension_numbers = #tpu.dot_dimension_numbers<[1], [0], [0], [1], [0, 0, 1, 1], [], []>} : vector<32x32xf32>, vector<32x1xf32>, vector<32x1xf32> -> vector<32x1xf32>
    %c0_29 = arith.constant 0 : index
    %c0_30 = arith.constant 0 : index
    %42 = vector.load %arg10[%c0_29, %c0_30] : memref<32x1xf32, #tpu.memory_space<vmem>>, vector<32x1xf32>
    %43 = arith.addf %41, %42 : vector<32x1xf32>
    %44 = vector.broadcast %43 : vector<32x1xf32> to vector<32x3xf32>
    %45 = arith.addf %39, %44 : vector<32x3xf32>
    %cst_31 = arith.constant 0.000000e+00 : f32
    %46 = vector.broadcast %cst_31 : f32 to vector<32x3xf32>
    %47 = arith.maximumf %45, %46 : vector<32x3xf32>
    %cst_32 = arith.constant dense<0.000000e+00> : vector<32xf32>
    %48 = vector.multi_reduction <add>, %47, %cst_32 [1] : vector<32x3xf32> to vector<32xf32>
    %49 = vector.shape_cast %48 : vector<32xf32> to vector<32x1xf32>
    %c0_33 = arith.constant 0 : index
    %c0_34 = arith.constant 0 : index
    %50 = vector.load %arg11[%c0_33, %c0_34] : memref<32x32xf32, #tpu.memory_space<vmem>>, vector<32x32xf32>
    %cst_35 = arith.constant dense<0.000000e+00> : vector<32x1xf32>
    %51 = tpu.matmul %50, %49, %cst_35 {dimension_numbers = #tpu.dot_dimension_numbers<[1], [0], [0], [1], [0, 0, 1, 1], [], []>} : vector<32x32xf32>, vector<32x1xf32>, vector<32x1xf32> -> vector<32x1xf32>
    %c0_36 = arith.constant 0 : index
    %c0_37 = arith.constant 0 : index
    %52 = vector.load %arg12[%c0_36, %c0_37] : memref<32x1xf32, #tpu.memory_space<vmem>>, vector<32x1xf32>
    %53 = arith.addf %51, %52 : vector<32x1xf32>
    %cst_38 = arith.constant 0.000000e+00 : f32
    %54 = vector.broadcast %cst_38 : f32 to vector<32x1xf32>
    %55 = arith.maximumf %53, %54 : vector<32x1xf32>
    %c0_39 = arith.constant 0 : index
    %c0_40 = arith.constant 0 : index
    %56 = vector.load %arg13[%c0_39, %c0_40] : memref<10x32xf32, #tpu.memory_space<vmem>>, vector<10x32xf32>
    %cst_41 = arith.constant dense<0.000000e+00> : vector<10x1xf32>
    %57 = tpu.matmul %56, %55, %cst_41 {dimension_numbers = #tpu.dot_dimension_numbers<[1], [0], [0], [1], [0, 0, 1, 1], [], []>} : vector<10x32xf32>, vector<32x1xf32>, vector<10x1xf32> -> vector<10x1xf32>
    %c0_42 = arith.constant 0 : index
    %c0_43 = arith.constant 0 : index
    %58 = vector.load %arg14[%c0_42, %c0_43] : memref<10x1xf32, #tpu.memory_space<vmem>>, vector<10x1xf32>
    %59 = arith.addf %57, %58 : vector<10x1xf32>
    %c0_44 = arith.constant 0 : index
    %c0_45 = arith.constant 0 : index
    %c0_46 = arith.constant 0 : index
    %60 = vector.load %arg15[%c0_44, %c0_45, %c0_46] : memref<1x10x1xf32, #tpu.memory_space<vmem>>, vector<1x10x1xf32>
    %61 = vector.shape_cast %60 : vector<1x10x1xf32> to vector<10x1xf32>
    %62 = vector.shape_cast %59 : vector<10x1xf32> to vector<1x10x1xf32>
    tpu.vector_store %arg15[%c0_44, %c0_45, %c0_46], %62 {strides = array<i32>} : memref<1x10x1xf32, #tpu.memory_space<vmem>>, vector<1x10x1xf32>,
    return
  }
  func.func @transform_0(%arg0: i32) -> (i32, i32, i32) {
    %c0_i32 = arith.constant 0 : i32
    %c0_i32_0 = arith.constant 0 : i32
    %c0_i32_1 = arith.constant 0 : i32
    return %arg0, %c0_i32, %c0_i32_0 : i32, i32, i32
  }
  func.func @transform_1(%arg0: i32) -> (i32, i32) {
    %c0_i32 = arith.constant 0 : i32
    %c0_i32_0 = arith.constant 0 : i32
    %c0_i32_1 = arith.constant 0 : i32
    return %c0_i32, %c0_i32_0 : i32, i32
  }
  func.func @transform_2(%arg0: i32) -> (i32, i32) {
    %c0_i32 = arith.constant 0 : i32
    %c0_i32_0 = arith.constant 0 : i32
    %c0_i32_1 = arith.constant 0 : i32
    return %c0_i32, %c0_i32_0 : i32, i32
  }
  func.func @transform_3(%arg0: i32) -> (i32, i32) {
    %c0_i32 = arith.constant 0 : i32
    %c0_i32_0 = arith.constant 0 : i32
    %c0_i32_1 = arith.constant 0 : i32
    return %c0_i32, %c0_i32_0 : i32, i32
  }
  func.func @transform_4(%arg0: i32) -> (i32, i32) {
    %c0_i32 = arith.constant 0 : i32
    %c0_i32_0 = arith.constant 0 : i32
    %c0_i32_1 = arith.constant 0 : i32
    return %c0_i32, %c0_i32_0 : i32, i32
  }
  func.func @transform_5(%arg0: i32) -> (i32, i32) {
    %c0_i32 = arith.constant 0 : i32
    %c0_i32_0 = arith.constant 0 : i32
    %c0_i32_1 = arith.constant 0 : i32
    return %c0_i32, %c0_i32_0 : i32, i32
  }
  func.func @transform_6(%arg0: i32) -> (i32, i32) {
    %c0_i32 = arith.constant 0 : i32
    %c0_i32_0 = arith.constant 0 : i32
    %c0_i32_1 = arith.constant 0 : i32
    return %c0_i32, %c0_i32_0 : i32, i32
  }
  func.func @transform_7(%arg0: i32) -> (i32, i32) {
    %c0_i32 = arith.constant 0 : i32
    %c0_i32_0 = arith.constant 0 : i32
    %c0_i32_1 = arith.constant 0 : i32
    return %c0_i32, %c0_i32_0 : i32, i32
  }
  func.func @transform_8(%arg0: i32) -> (i32, i32) {
    %c0_i32 = arith.constant 0 : i32
    %c0_i32_0 = arith.constant 0 : i32
    %c0_i32_1 = arith.constant 0 : i32
    return %c0_i32, %c0_i32_0 : i32, i32
  }
  func.func @transform_9(%arg0: i32) -> (i32, i32) {
    %c0_i32 = arith.constant 0 : i32
    %c0_i32_0 = arith.constant 0 : i32
    %c0_i32_1 = arith.constant 0 : i32
    return %c0_i32, %c0_i32_0 : i32, i32
  }
  func.func @transform_10(%arg0: i32) -> (i32, i32) {
    %c0_i32 = arith.constant 0 : i32
    %c0_i32_0 = arith.constant 0 : i32
    %c0_i32_1 = arith.constant 0 : i32
    return %c0_i32, %c0_i32_0 : i32, i32
  }
  func.func @transform_11(%arg0: i32) -> (i32, i32) {
    %c0_i32 = arith.constant 0 : i32
    %c0_i32_0 = arith.constant 0 : i32
    %c0_i32_1 = arith.constant 0 : i32
    return %c0_i32, %c0_i32_0 : i32, i32
  }
  func.func @transform_12(%arg0: i32) -> (i32, i32) {
    %c0_i32 = arith.constant 0 : i32
    %c0_i32_0 = arith.constant 0 : i32
    %c0_i32_1 = arith.constant 0 : i32
    return %c0_i32, %c0_i32_0 : i32, i32
  }
  func.func @transform_13(%arg0: i32) -> (i32, i32) {
    %c0_i32 = arith.constant 0 : i32
    %c0_i32_0 = arith.constant 0 : i32
    %c0_i32_1 = arith.constant 0 : i32
    return %c0_i32, %c0_i32_0 : i32, i32
  }
  func.func @transform_14(%arg0: i32) -> (i32, i32, i32) {
    %c0_i32 = arith.constant 0 : i32
    %c0_i32_0 = arith.constant 0 : i32
    %c0_i32_1 = arith.constant 0 : i32
    return %arg0, %c0_i32, %c0_i32_0 : i32, i32, i32
  }
}

</mosaic_0001>

<llo_original>
// kernel: geminn_forward.1
$region0: #{geminn_forward.1}
  #allocation0 [shape = 'u32[]', space=smem, size = 0x4, offset = 0x4, fixed_abs, tag = 'smem constant byte address 0x4 - core index']
  #allocation1 [shape = 'u32[144,128]{1,0:T(1,128)}', space=vmem, size = 0x12000, scoped, tag = 'internal scratch']
  %s0 = inlined_call_operand.vmem [shape: f32[2,36,768], index: 0, kind: input, shape index: {}]
  %s1 = inlined_call_operand.vmem [shape: f32[3,768], index: 1, kind: input, shape index: {}]
  %s2 = inlined_call_operand.vmem [shape: f32[32,36], index: 2, kind: input, shape index: {}]
  %s3 = inlined_call_operand.vmem [shape: f32[32,1], index: 3, kind: input, shape index: {}]
  %s4 = inlined_call_operand.vmem [shape: f32[32,36], index: 4, kind: input, shape index: {}]
  %s5 = inlined_call_operand.vmem [shape: f32[32,1], index: 5, kind: input, shape index: {}]
  %s6 = inlined_call_operand.vmem [shape: f32[32,32], index: 6, kind: input, shape index: {}]
  %s7 = inlined_call_operand.vmem [shape: f32[32,1], index: 7, kind: input, shape index: {}]
  %s8 = inlined_call_operand.vmem [shape: f32[32,32], index: 8, kind: input, shape index: {}]
  %s9 = inlined_call_operand.vmem [shape: f32[32,1], index: 9, kind: input, shape index: {}]
  %s10 = inlined_call_operand.vmem [shape: f32[32,32], index: 10, kind: input, shape index: {}]
  %s11 = inlined_call_operand.vmem [shape: f32[32,1], index: 11, kind: input, shape index: {}]
  %s12 = inlined_call_operand.vmem [shape: f32[10,32], index: 12, kind: input, shape index: {}]
  %s13 = inlined_call_operand.vmem [shape: f32[10,1], index: 13, kind: input, shape index: {}]
  %s14 = inlined_call_operand.vmem [shape: f32[2,10,1], index: 14, kind: output, shape index: {}]
  %s15 = sld [smem:[#allocation0]]
  $region89: #{geminn_forward.1} parent=0
    _
  %s17 = ssub.s32 1, %s15
  %s18 = scalar_select 0, %s17, %s15
  loop: start=0, step=1, limit=4
  $region2: #{geminn_forward.1} parent=0 // loop_pre_header
    _
  $region3: #{geminn_forward.1} parent=0 // loop_header
    %s20 = sphi 0, %s24
    %p21 = scmp.ge.s32.totalorder %s20, 4
    %s30 = sphi 0, %s32
    %s33 = sphi 0, %s30
    %s34 = sphi 0, %s33
    %s50 = sphi 0, %s34
    %s54 = sphi 0, %s54
    %s56 = sphi 0, %s54
    %s57 = sphi 0, %s56
    %s71 = sphi 0, %s57
    %s75 = sphi 0, %s75
    %s77 = sphi 0, %s75
    %s78 = sphi 0, %s77
    %s92 = sphi 0, %s78
    %s96 = sphi 0, %s96
    %s98 = sphi 0, %s96
    %s99 = sphi 0, %s98
    %s113 = sphi 0, %s99
    %s117 = sphi 0, %s117
    %s119 = sphi 0, %s117
    %s120 = sphi 0, %s119
    %s134 = sphi 0, %s120
    %s138 = sphi 0, %s138
    %s140 = sphi 0, %s138
    %s141 = sphi 0, %s140
    %s155 = sphi 0, %s141
    %s159 = sphi 0, %s159
    %s161 = sphi 0, %s159
    %s162 = sphi 0, %s161
    %s176 = sphi 0, %s162
    %s180 = sphi 0, %s180
    %s182 = sphi 0, %s180
    %s183 = sphi 0, %s182
    %s197 = sphi 0, %s183
    %s201 = sphi 0, %s201
    %s203 = sphi 0, %s201
    %s204 = sphi 0, %s203
    %s218 = sphi 0, %s204
    %s222 = sphi 0, %s222
    %s224 = sphi 0, %s222
    %s225 = sphi 0, %s224
    %s239 = sphi 0, %s225
    %s243 = sphi 0, %s243
    %s245 = sphi 0, %s243
    %s246 = sphi 0, %s245
    %s260 = sphi 0, %s246
    %s264 = sphi 0, %s264
    %s266 = sphi 0, %s264
    %s267 = sphi 0, %s266
    %s281 = sphi 0, %s267
    %s285 = sphi 0, %s285
    %s287 = sphi 0, %s285
    %s288 = sphi 0, %s287
    %s302 = sphi 0, %s288
    %s306 = sphi 0, %s306
    %s308 = sphi 0, %s306
    %s309 = sphi 0, %s308
    %s323 = sphi 0, %s309
    %s329 = sphi 0, %s331
    %s332 = sphi 0, %s329
    %s333 = sphi 0, %s332
    %s349 = sphi 0, %s333
  $region4: #{geminn_forward.1} parent=0 // loop_header_branch
    %23 = sbr.rel (%p21) target = $region8
  $region5: #{geminn_forward.1} parent=0 // loop_body
    %s25 = ssub.s32 %s20, 1
    %s26 = ssub.s32 %s20, 2
    %s27 = sadd.s32 %s20, 1
    %s28 = ssub.s32 %s20, %s27
    %p29 = scmp.eq.s32.totalorder %s28, 0
    %s31 = sadd.s32 %s30, 1
    %s32 = scalar_select %p29, %s30, %s31
    %p35 = pneg %p29
    %p36 = scmp.eq.s32.totalorder %s20, 1
    %p37 = por %p35, %p36
    %p38 = scmp.ne.s32.totalorder %s30, %s33
    %p39 = scmp.eq.s32.totalorder %s20, 0
    %p40 = por %p38, %p39
    %p41 = scmp.ne.s32.totalorder %s30, %s33
    %p42 = scmp.eq.s32.totalorder %s25, 1
    %p43 = por %p41, %p42
    %p44 = scmp.ne.s32.totalorder %s33, %s34
    %p45 = scmp.eq.s32.totalorder %s25, 0
    %p46 = por %p44, %p45
    %p47 = scmp.ne.s32.totalorder %s33, %s34
    %p48 = scmp.eq.s32.totalorder %s26, 1
    %p49 = por %p47, %p48
    %p51 = scmp.ne.s32.totalorder %s34, %s50
    %p52 = scmp.eq.s32.totalorder %s26, 0
    %p53 = por %p51, %p52
    %s55 = sadd.s32 %s54, 1
    %p58 = scmp.eq.s32.totalorder %s20, 1
    %p59 = scmp.ne.s32.totalorder %s54, %s56
    %p60 = scmp.eq.s32.totalorder %s20, 0
    %p61 = por %p59, %p60
    %p62 = scmp.ne.s32.totalorder %s54, %s56
    %p63 = scmp.eq.s32.totalorder %s25, 1
    %p64 = por %p62, %p63
    %p65 = scmp.ne.s32.totalorder %s56, %s57
    %p66 = scmp.eq.s32.totalorder %s25, 0
    %p67 = por %p65, %p66
    %p68 = scmp.ne.s32.totalorder %s56, %s57
    %p69 = scmp.eq.s32.totalorder %s26, 1
    %p70 = por %p68, %p69
    %p72 = scmp.ne.s32.totalorder %s57, %s71
    %p73 = scmp.eq.s32.totalorder %s26, 0
    %p74 = por %p72, %p73
    %s76 = sadd.s32 %s75, 1
    %p79 = scmp.eq.s32.totalorder %s20, 1
    %p80 = scmp.ne.s32.totalorder %s75, %s77
    %p81 = scmp.eq.s32.totalorder %s20, 0
    %p82 = por %p80, %p81
    %p83 = scmp.ne.s32.totalorder %s75, %s77
    %p84 = scmp.eq.s32.totalorder %s25, 1
    %p85 = por %p83, %p84
    %p86 = scmp.ne.s32.totalorder %s77, %s78
    %p87 = scmp.eq.s32.totalorder %s25, 0
    %p88 = por %p86, %p87
    %p89 = scmp.ne.s32.totalorder %s77, %s78
    %p90 = scmp.eq.s32.totalorder %s26, 1
    %p91 = por %p89, %p90
    %p93 = scmp.ne.s32.totalorder %s78, %s92
    %p94 = scmp.eq.s32.totalorder %s26, 0
    %p95 = por %p93, %p94
    %s97 = sadd.s32 %s96, 1
    %p100 = scmp.eq.s32.totalorder %s20, 1
    %p101 = scmp.ne.s32.totalorder %s96, %s98
    %p102 = scmp.eq.s32.totalorder %s20, 0
    %p103 = por %p101, %p102
    %p104 = scmp.ne.s32.totalorder %s96, %s98
    %p105 = scmp.eq.s32.totalorder %s25, 1
    %p106 = por %p104, %p105
    %p107 = scmp.ne.s32.totalorder %s98, %s99
    %p108 = scmp.eq.s32.totalorder %s25, 0
    %p109 = por %p107, %p108
    %p110 = scmp.ne.s32.totalorder %s98, %s99
    %p111 = scmp.eq.s32.totalorder %s26, 1
    %p112 = por %p110, %p111
    %p114 = scmp.ne.s32.totalorder %s99, %s113
    %p115 = scmp.eq.s32.totalorder %s26, 0
    %p116 = por %p114, %p115
    %s118 = sadd.s32 %s117, 1
    %p121 = scmp.eq.s32.totalorder %s20, 1
    %p122 = scmp.ne.s32.totalorder %s117, %s119
    %p123 = scmp.eq.s32.totalorder %s20, 0
    %p124 = por %p122, %p123
    %p125 = scmp.ne.s32.totalorder %s117, %s119
    %p126 = scmp.eq.s32.totalorder %s25, 1
    %p127 = por %p125, %p126
    %p128 = scmp.ne.s32.totalorder %s119, %s120
    %p129 = scmp.eq.s32.totalorder %s25, 0
    %p130 = por %p128, %p129
    %p131 = scmp.ne.s32.totalorder %s119, %s120
    %p132 = scmp.eq.s32.totalorder %s26, 1
    %p133 = por %p131, %p132
    %p135 = scmp.ne.s32.totalorder %s120, %s134
    %p136 = scmp.eq.s32.totalorder %s26, 0
    %p137 = por %p135, %p136
    %s139 = sadd.s32 %s138, 1
    %p142 = scmp.eq.s32.totalorder %s20, 1
    %p143 = scmp.ne.s32.totalorder %s138, %s140
    %p144 = scmp.eq.s32.totalorder %s20, 0
    %p145 = por %p143, %p144
    %p146 = scmp.ne.s32.totalorder %s138, %s140
    %p147 = scmp.eq.s32.totalorder %s25, 1
    %p148 = por %p146, %p147
    %p149 = scmp.ne.s32.totalorder %s140, %s141
    %p150 = scmp.eq.s32.totalorder %s25, 0
    %p151 = por %p149, %p150
    %p152 = scmp.ne.s32.totalorder %s140, %s141
    %p153 = scmp.eq.s32.totalorder %s26, 1
    %p154 = por %p152, %p153
    %p156 = scmp.ne.s32.totalorder %s141, %s155
    %p157 = scmp.eq.s32.totalorder %s26, 0
    %p158 = por %p156, %p157
    %s160 = sadd.s32 %s159, 1
    %p163 = scmp.eq.s32.totalorder %s20, 1
    %p164 = scmp.ne.s32.totalorder %s159, %s161
    %p165 = scmp.eq.s32.totalorder %s20, 0
    %p166 = por %p164, %p165
    %p167 = scmp.ne.s32.totalorder %s159, %s161
    %p168 = scmp.eq.s32.totalorder %s25, 1
    %p169 = por %p167, %p168
    %p170 = scmp.ne.s32.totalorder %s161, %s162
    %p171 = scmp.eq.s32.totalorder %s25, 0
    %p172 = por %p170, %p171
    %p173 = scmp.ne.s32.totalorder %s161, %s162
    %p174 = scmp.eq.s32.totalorder %s26, 1
    %p175 = por %p173, %p174
    %p177 = scmp.ne.s32.totalorder %s162, %s176
    %p178 = scmp.eq.s32.totalorder %s26, 0
    %p179 = por %p177, %p178
    %s181 = sadd.s32 %s180, 1
    %p184 = scmp.eq.s32.totalorder %s20, 1
    %p185 = scmp.ne.s32.totalorder %s180, %s182
    %p186 = scmp.eq.s32.totalorder %s20, 0
    %p187 = por %p185, %p186
    %p188 = scmp.ne.s32.totalorder %s180, %s182
    %p189 = scmp.eq.s32.totalorder %s25, 1
    %p190 = por %p188, %p189
    %p191 = scmp.ne.s32.totalorder %s182, %s183
    %p192 = scmp.eq.s32.totalorder %s25, 0
    %p193 = por %p191, %p192
    %p194 = scmp.ne.s32.totalorder %s182, %s183
    %p195 = scmp.eq.s32.totalorder %s26, 1
    %p196 = por %p194, %p195
    %p198 = scmp.ne.s32.totalorder %s183, %s197
    %p199 = scmp.eq.s32.totalorder %s26, 0
    %p200 = por %p198, %p199
    %s202 = sadd.s32 %s201, 1
    %p205 = scmp.eq.s32.totalorder %s20, 1
    %p206 = scmp.ne.s32.totalorder %s201, %s203
    %p207 = scmp.eq.s32.totalorder %s20, 0
    %p208 = por %p206, %p207
    %p209 = scmp.ne.s32.totalorder %s201, %s203
    %p210 = scmp.eq.s32.totalorder %s25, 1
    %p211 = por %p209, %p210
    %p212 = scmp.ne.s32.totalorder %s203, %s204
    %p213 = scmp.eq.s32.totalorder %s25, 0
    %p214 = por %p212, %p213
    %p215 = scmp.ne.s32.totalorder %s203, %s204
    %p216 = scmp.eq.s32.totalorder %s26, 1
    %p217 = por %p215, %p216
    %p219 = scmp.ne.s32.totalorder %s204, %s218
    %p220 = scmp.eq.s32.totalorder %s26, 0
    %p221 = por %p219, %p220
    %s223 = sadd.s32 %s222, 1
    %p226 = scmp.eq.s32.totalorder %s20, 1
    %p227 = scmp.ne.s32.totalorder %s222, %s224
    %p228 = scmp.eq.s32.totalorder %s20, 0
    %p229 = por %p227, %p228
    %p230 = scmp.ne.s32.totalorder %s222, %s224
    %p231 = scmp.eq.s32.totalorder %s25, 1
    %p232 = por %p230, %p231
    %p233 = scmp.ne.s32.totalorder %s224, %s225
    %p234 = scmp.eq.s32.totalorder %s25, 0
    %p235 = por %p233, %p234
    %p236 = scmp.ne.s32.totalorder %s224, %s225
    %p237 = scmp.eq.s32.totalorder %s26, 1
    %p238 = por %p236, %p237
    %p240 = scmp.ne.s32.totalorder %s225, %s239
    %p241 = scmp.eq.s32.totalorder %s26, 0
    %p242 = por %p240, %p241
    %s244 = sadd.s32 %s243, 1
    %p247 = scmp.eq.s32.totalorder %s20, 1
    %p248 = scmp.ne.s32.totalorder %s243, %s245
    %p249 = scmp.eq.s32.totalorder %s20, 0
    %p250 = por %p248, %p249
    %p251 = scmp.ne.s32.totalorder %s243, %s245
    %p252 = scmp.eq.s32.totalorder %s25, 1
    %p253 = por %p251, %p252
    %p254 = scmp.ne.s32.totalorder %s245, %s246
    %p255 = scmp.eq.s32.totalorder %s25, 0
    %p256 = por %p254, %p255
    %p257 = scmp.ne.s32.totalorder %s245, %s246
    %p258 = scmp.eq.s32.totalorder %s26, 1
    %p259 = por %p257, %p258
    %p261 = scmp.ne.s32.totalorder %s246, %s260
    %p262 = scmp.eq.s32.totalorder %s26, 0
    %p263 = por %p261, %p262
    %s265 = sadd.s32 %s264, 1
    %p268 = scmp.eq.s32.totalorder %s20, 1
    %p269 = scmp.ne.s32.totalorder %s264, %s266
    %p270 = scmp.eq.s32.totalorder %s20, 0
    %p271 = por %p269, %p270
    %p272 = scmp.ne.s32.totalorder %s264, %s266
    %p273 = scmp.eq.s32.totalorder %s25, 1
    %p274 = por %p272, %p273
    %p275 = scmp.ne.s32.totalorder %s266, %s267
    %p276 = scmp.eq.s32.totalorder %s25, 0
    %p277 = por %p275, %p276
    %p278 = scmp.ne.s32.totalorder %s266, %s267
    %p279 = scmp.eq.s32.totalorder %s26, 1
    %p280 = por %p278, %p279
    %p282 = scmp.ne.s32.totalorder %s267, %s281
    %p283 = scmp.eq.s32.totalorder %s26, 0
    %p284 = por %p282, %p283
    %s286 = sadd.s32 %s285, 1
    %p289 = scmp.eq.s32.totalorder %s20, 1
    %p290 = scmp.ne.s32.totalorder %s285, %s287
    %p291 = scmp.eq.s32.totalorder %s20, 0
    %p292 = por %p290, %p291
    %p293 = scmp.ne.s32.totalorder %s285, %s287
    %p294 = scmp.eq.s32.totalorder %s25, 1
    %p295 = por %p293, %p294
    %p296 = scmp.ne.s32.totalorder %s287, %s288
    %p297 = scmp.eq.s32.totalorder %s25, 0
    %p298 = por %p296, %p297
    %p299 = scmp.ne.s32.totalorder %s287, %s288
    %p300 = scmp.eq.s32.totalorder %s26, 1
    %p301 = por %p299, %p300
    %p303 = scmp.ne.s32.totalorder %s288, %s302
    %p304 = scmp.eq.s32.totalorder %s26, 0
    %p305 = por %p303, %p304
    %s307 = sadd.s32 %s306, 1
    %p310 = scmp.eq.s32.totalorder %s20, 1
    %p311 = scmp.ne.s32.totalorder %s306, %s308
    %p312 = scmp.eq.s32.totalorder %s20, 0
    %p313 = por %p311, %p312
    %p314 = scmp.ne.s32.totalorder %s306, %s308
    %p315 = scmp.eq.s32.totalorder %s25, 1
    %p316 = por %p314, %p315
    %p317 = scmp.ne.s32.totalorder %s308, %s309
    %p318 = scmp.eq.s32.totalorder %s25, 0
    %p319 = por %p317, %p318
    %p320 = scmp.ne.s32.totalorder %s308, %s309
    %p321 = scmp.eq.s32.totalorder %s26, 1
    %p322 = por %p320, %p321
    %p324 = scmp.ne.s32.totalorder %s309, %s323
    %p325 = scmp.eq.s32.totalorder %s26, 0
    %p326 = por %p324, %p325
    %s327 = ssub.s32 %s20, %s27
    %p328 = scmp.eq.s32.totalorder %s327, 0
    %s330 = sadd.s32 %s329, 1
    %s331 = scalar_select %p328, %s329, %s330
    %p334 = pneg %p328
    %p335 = scmp.eq.s32.totalorder %s20, 1
    %p336 = por %p334, %p335
    %p337 = scmp.ne.s32.totalorder %s329, %s332
    %p338 = scmp.eq.s32.totalorder %s20, 0
    %p339 = por %p337, %p338
    %p340 = scmp.ne.s32.totalorder %s329, %s332
    %p341 = scmp.eq.s32.totalorder %s25, 1
    %p342 = por %p340, %p341
    %p343 = scmp.ne.s32.totalorder %s332, %s333
    %p344 = scmp.eq.s32.totalorder %s25, 0
    %p345 = por %p343, %p344
    %p346 = scmp.ne.s32.totalorder %s332, %s333
    %p347 = scmp.eq.s32.totalorder %s26, 1
    %p348 = por %p346, %p347
    %p350 = scmp.ne.s32.totalorder %s333, %s349
    %p351 = scmp.eq.s32.totalorder %s26, 0
    %p352 = por %p350, %p351
    %p353 = scmp.le.s32.totalorder 1, %s20
    %p354 = scmp.lt.s32.totalorder %s20, 3
    %p355 = pnand %p353, %p354
    %p356 = pneg %p355
    // Predicated region
    $region9: #{geminn_forward.1} parent=5 // pred_check
      _
    $region10: #{geminn_forward.1} parent=5 // pred_check_branch
      %358 = sbr.rel (%p355) target = $region12
    $region11: #{geminn_forward.1} parent=5 // pred_region
      %s359 = ssub.s32 %s20, 1
      // Predicated region
      $region13: #{geminn_forward.1} parent=11 // pred_check
        %p360 = pneg %p67
      $region14: #{geminn_forward.1} parent=11 // pred_check_branch
        %362 = sbr.rel (%p360) target = $region16
      $region15: #{geminn_forward.1} parent=11 // pred_region
        _
      $region16: #{geminn_forward.1} parent=11 // pred_fallthru
        _
      // Predicated region
      $region17: #{geminn_forward.1} parent=11 // pred_check
        %p363 = pneg %p88
      $region18: #{geminn_forward.1} parent=11 // pred_check_branch
        %365 = sbr.rel (%p363) target = $region20
      $region19: #{geminn_forward.1} parent=11 // pred_region
        _
      $region20: #{geminn_forward.1} parent=11 // pred_fallthru
        _
      // Predicated region
      $region21: #{geminn_forward.1} parent=11 // pred_check
        %p366 = pneg %p109
      $region22: #{geminn_forward.1} parent=11 // pred_check_branch
        %368 = sbr.rel (%p366) target = $region24
      $region23: #{geminn_forward.1} parent=11 // pred_region
        _
      $region24: #{geminn_forward.1} parent=11 // pred_fallthru
        _
      // Predicated region
      $region25: #{geminn_forward.1} parent=11 // pred_check
        %p369 = pneg %p130
      $region26: #{geminn_forward.1} parent=11 // pred_check_branch
        %371 = sbr.rel (%p369) target = $region28
      $region27: #{geminn_forward.1} parent=11 // pred_region
        _
      $region28: #{geminn_forward.1} parent=11 // pred_fallthru
        _
      // Predicated region
      $region29: #{geminn_forward.1} parent=11 // pred_check
        %p372 = pneg %p151
      $region30: #{geminn_forward.1} parent=11 // pred_check_branch
        %374 = sbr.rel (%p372) target = $region32
      $region31: #{geminn_forward.1} parent=11 // pred_region
        _
      $region32: #{geminn_forward.1} parent=11 // pred_fallthru
        _
      // Predicated region
      $region33: #{geminn_forward.1} parent=11 // pred_check
        %p375 = pneg %p172
      $region34: #{geminn_forward.1} parent=11 // pred_check_branch
        %377 = sbr.rel (%p375) target = $region36
      $region35: #{geminn_forward.1} parent=11 // pred_region
        _
      $region36: #{geminn_forward.1} parent=11 // pred_fallthru
        _
      // Predicated region
      $region37: #{geminn_forward.1} parent=11 // pred_check
        %p378 = pneg %p193
      $region38: #{geminn_forward.1} parent=11 // pred_check_branch
        %380 = sbr.rel (%p378) target = $region40
      $region39: #{geminn_forward.1} parent=11 // pred_region
        _
      $region40: #{geminn_forward.1} parent=11 // pred_fallthru
        _
      // Predicated region
      $region41: #{geminn_forward.1} parent=11 // pred_check
        %p381 = pneg %p214
      $region42: #{geminn_forward.1} parent=11 // pred_check_branch
        %383 = sbr.rel (%p381) target = $region44
      $region43: #{geminn_forward.1} parent=11 // pred_region
        _
      $region44: #{geminn_forward.1} parent=11 // pred_fallthru
        _
      // Predicated region
      $region45: #{geminn_forward.1} parent=11 // pred_check
        %p384 = pneg %p235
      $region46: #{geminn_forward.1} parent=11 // pred_check_branch
        %386 = sbr.rel (%p384) target = $region48
      $region47: #{geminn_forward.1} parent=11 // pred_region
        _
      $region48: #{geminn_forward.1} parent=11 // pred_fallthru
        _
      // Predicated region
      $region49: #{geminn_forward.1} parent=11 // pred_check
        %p387 = pneg %p256
      $region50: #{geminn_forward.1} parent=11 // pred_check_branch
        %389 = sbr.rel (%p387) target = $region52
      $region51: #{geminn_forward.1} parent=11 // pred_region
        _
      $region52: #{geminn_forward.1} parent=11 // pred_fallthru
        _
      // Predicated region
      $region53: #{geminn_forward.1} parent=11 // pred_check
        %p390 = pneg %p277
      $region54: #{geminn_forward.1} parent=11 // pred_check_branch
        %392 = sbr.rel (%p390) target = $region56
      $region55: #{geminn_forward.1} parent=11 // pred_region
        _
      $region56: #{geminn_forward.1} parent=11 // pred_fallthru
        _
      // Predicated region
      $region57: #{geminn_forward.1} parent=11 // pred_check
        %p393 = pneg %p298
      $region58: #{geminn_forward.1} parent=11 // pred_check_branch
        %395 = sbr.rel (%p393) target = $region60
      $region59: #{geminn_forward.1} parent=11 // pred_region
        _
      $region60: #{geminn_forward.1} parent=11 // pred_fallthru
        _
      // Predicated region
      $region61: #{geminn_forward.1} parent=11 // pred_check
        %p396 = pneg %p319
      $region62: #{geminn_forward.1} parent=11 // pred_check_branch
        %398 = sbr.rel (%p396) target = $region64
      $region63: #{geminn_forward.1} parent=11 // pred_region
        _
      $region64: #{geminn_forward.1} parent=11 // pred_fallthru
        _
    $region12: #{geminn_forward.1} parent=5 // pred_fallthru
      _
    %p399 = scmp.lt.s32.totalorder %s20, 2
    // Predicated region
    $region65: #{geminn_forward.1} parent=5 // pred_check
      %p400 = pneg %p399
    $region66: #{geminn_forward.1} parent=5 // pred_check_branch
      %402 = sbr.rel (%p400) target = $region68
    $region67: #{geminn_forward.1} parent=5 // pred_region
      // Predicated region
      $region69: #{geminn_forward.1} parent=67 // pred_check
        %p403 = pneg %p40
      $region70: #{geminn_forward.1} parent=67 // pred_check_branch
        %405 = sbr.rel (%p403) target = $region72
      $region71: #{geminn_forward.1} parent=67 // pred_region
        %p406 = scmp.lt.s32.totalorder %s20, 1
        %s407 = scalar_select %p406, %s20, 1
        %s408 = smul.addr %s407, 30
        %s409 = smul.addr %s408, 8
        %s410 = scalar_lea.vmem %s0, %s409
      $region72: #{geminn_forward.1} parent=67 // pred_fallthru
        _
    $region68: #{geminn_forward.1} parent=5 // pred_fallthru
      _
    %p411 = scmp.le.s32.totalorder 1, %s20
    %p412 = scmp.lt.s32.totalorder %s20, 3
    %p413 = pnand %p411, %p412
    %p414 = pneg %p413
    // Predicated region
    $region73: #{geminn_forward.1} parent=5 // pred_check
      _
    $region74: #{geminn_forward.1} parent=5 // pred_check_branch
      %416 = sbr.rel (%p413) target = $region76
    $region75: #{geminn_forward.1} parent=5 // pred_region
      %s417 = ssub.s32 %s20, 1
      %p418 = scmp.lt.s32.totalorder %s25, 1
      %s419 = scalar_select %p418, %s25, 1
      %s420 = smul.addr %s419, 30
      %s421 = smul.addr %s420, 8
      %s422 = scalar_lea.vmem %s0, %s421
      %p423 = pneg %p46
      %p424 = pneg %p43
      %p425 = pneg %p67
      %p426 = pneg %p64
      %p427 = pneg %p88
      %p428 = pneg %p85
      %p429 = pneg %p109
      %p430 = pneg %p106
      %p431 = pneg %p130
      %p432 = pneg %p127
      %p433 = pneg %p151
      %p434 = pneg %p148
      %p435 = pneg %p172
      %p436 = pneg %p169
      %p437 = pneg %p193
      %p438 = pneg %p190
      %p439 = pneg %p214
      %p440 = pneg %p211
      %p441 = pneg %p235
      %p442 = pneg %p232
      %p443 = pneg %p256
      %p444 = pneg %p253
      %p445 = pneg %p277
      %p446 = pneg %p274
      %p447 = pneg %p298
      %p448 = pneg %p295
      %p449 = pneg %p319
      %p450 = pneg %p316
      %p451 = pneg %p345
      %p452 = pneg %p342
      %p453 = scmp.lt.s32.totalorder %s25, 1
      %s454 = scalar_select %p453, %s25, 1
      %s455 = smul.addr %s454, 2
      %s456 = smul.addr %s455, 8
      %s457 = scalar_lea.vmem %s14, %s456
      %p458 = scmp.lt.s32.totalorder %s25, 1
      %s459 = scalar_select %p458, %s25, 1
      %s460 = smul.addr %s459, 30
      %s461 = smul.addr %s460, 8
      %s462 = scalar_lea.vmem %s0, %s461
      %p463 = scmp.lt.s32.totalorder %s25, 1
      %s464 = scalar_select %p463, %s25, 1
      %s465 = smul.addr %s464, 2
      %s466 = smul.addr %s465, 8
      %s467 = scalar_lea.vmem %s14, %s466
      %v468 = vld [vmem:[%s462] sm:$0xff]
      %v469 = vld [vmem:[%s462 + $0x8] sm:$0xff]
      %v470 = vld [vmem:[%s462 + $0x10] sm:$0xff]
      %v471 = vld [vmem:[%s462 + $0x18] sm:$0xff]
      %v472 = vld [vmem:[%s462 + $0x20] sm:$0xff]
      %v473 = vld [vmem:[%s462 + $0x28] sm:$0xff]
      %v474 = vld [vmem:[%s462 + $0x30] sm:$0xff]
      %v475 = vld [vmem:[%s462 + $0x38] sm:$0xff]
      %v476 = vld [vmem:[%s462 + $0x40] sm:$0xff]
      %v477 = vld [vmem:[%s462 + $0x48] sm:$0xff]
      %v478 = vld [vmem:[%s462 + $0x50] sm:$0xff]
      %v479 = vld [vmem:[%s462 + $0x58] sm:$0xff]
      %v480 = vld [vmem:[%s462 + $0x60] sm:$0xff]
      %v481 = vld [vmem:[%s462 + $0x68] sm:$0xff]
      %v482 = vld [vmem:[%s462 + $0x70] sm:$0xff]
      %v483 = vld [vmem:[%s462 + $0x78] sm:$0xff]
      %v484 = vld [vmem:[%s462 + $0x80] sm:$0xff]
      %v485 = vld [vmem:[%s462 + $0x88] sm:$0xff]
      %v486 = vld [vmem:[%s462 + $0x90] sm:$0xff]
      %v487 = vld [vmem:[%s462 + $0x98] sm:$0xff]
      %v488 = vld [vmem:[%s462 + $0xa0] sm:$0xff]
      %v489 = vld [vmem:[%s462 + $0xa8] sm:$0xff]
      %v490 = vld [vmem:[%s462 + $0xb0] sm:$0xff]
      %v491 = vld [vmem:[%s462 + $0xb8] sm:$0xff]
      %v492 = vld [vmem:[%s462 + $0xc0] sm:$0xf]
      %v493 = vld [vmem:[%s462 + $0xc8] sm:$0xf]
      %v494 = vld [vmem:[%s462 + $0xd0] sm:$0xf]
      %v495 = vld [vmem:[%s462 + $0xd8] sm:$0xf]
      %v496 = vld [vmem:[%s462 + $0xe0] sm:$0xf]
      %v497 = vld [vmem:[%s462 + $0xe8] sm:$0xf]
      %v498 = vld [vmem:[%s2] sm:$0xff]
      %v499 = vld [vmem:[%s2 + $0x8] sm:$0xff]
      %v500 = vld [vmem:[%s2 + $0x10] sm:$0xff]
      %v501 = vld [vmem:[%s2 + $0x18] sm:$0xff]
      %v502 = vld [vmem:[%s3] sm:$0xff]
      %v503 = vld [vmem:[%s3 + $0x8] sm:$0xff]
      %v504 = vld [vmem:[%s3 + $0x10] sm:$0xff]
      %v505 = vld [vmem:[%s3 + $0x18] sm:$0xff]
      %507 = vset.pattern.permute.xlu0 0
      %508 = vperm.xlu0 %507, %v502
      %v509 = vpop.permute.xlu0 %508
      %512 = vset.pattern.permute.xlu0 0
      %513 = vperm.xlu0 %512, %v503
      %v514 = vpop.permute.xlu0 %513
      %517 = vset.pattern.permute.xlu0 0
      %518 = vperm.xlu0 %517, %v504
      %v519 = vpop.permute.xlu0 %518
      %522 = vset.pattern.permute.xlu0 0
      %523 = vperm.xlu0 %522, %v505
      %v524 = vpop.permute.xlu0 %523
      %vm526 = vcmask 293888
      %v528 = vsel %vm526, %v498, 0
      %v531 = vsel %vm526, %v499, 0
      %v534 = vsel %vm526, %v500, 0
      %v537 = vsel %vm526, %v501, 0
      %vm539 = vcmask 1043456
      %v541 = vsel %vm539, %v492, 0
      %v544 = vsel %vm539, %v493, 0
      %v547 = vsel %vm539, %v494, 0
      %v550 = vsel %vm539, %v495, 0
      %v553 = vsel %vm539, %v496, 0
      %v556 = vsel %vm539, %v497, 0
      %558 = vmatprep.subr.mxu0 0.0
      %559 = vmatpush1.msra.mxu0 0.0
      %560 = vmatprep.subr.mxu0 0.0
      %561 = vmatpush1.msra.mxu0 0.0
      %562 = vmatprep.subr.mxu0 0.0
      %563 = vmatpush1.msra.mxu0 0.0
      %564 = vmatprep.subr.mxu0 0.0
      %565 = vmatpush1.msra.mxu0 0.0
      %566 = vmatprep.subr.mxu0 0.0
      %567 = vmatpush1.msra.mxu0 0.0
      %568 = vmatprep.subr.mxu0 0.0
      %569 = vmatpush1.msra.mxu0 0.0
      %570 = vmatprep.subr.mxu0 0.0
      %571 = vmatpush1.msra.mxu0 0.0
      %572 = vmatprep.subr.mxu0 0.0
      %573 = vmatpush1.msra.mxu0 0.0
      %574 = vmatprep.subr.mxu0 0.0
      %575 = vmatpush1.msra.mxu0 0.0
      %576 = vmatprep.subr.mxu0 0.0
      %577 = vmatpush1.msra.mxu0 0.0
      %578 = vmatprep.subr.mxu0 0.0
      %579 = vmatpush1.msra.mxu0 0.0
      %580 = vmatprep.subr.mxu0 %v544
      %581 = vmatpush1.msra.mxu0 %v541
      %582 = vmatprep.subr.mxu0 %v487
      %583 = vmatpush1.msra.mxu0 %v486
      %584 = vmatprep.subr.mxu0 %v481
      %585 = vmatpush1.msra.mxu0 %v480
      %586 = vmatprep.subr.mxu0 %v475
      %587 = vmatpush1.msra.mxu0 %v474
      %588 = vmatprep.subr.mxu0 %v469
      %589 = vmatpush1.msra.mxu0 %v468
      %590 = vmatprep.subr.mxu0 0.0
      %591 = vmatpush2.msra.mxu0 0.0
      %592 = vmatprep.subr.mxu0 0.0
      %593 = vmatpush2.msra.mxu0 0.0
      %594 = vmatprep.subr.mxu0 0.0
      %595 = vmatpush2.msra.mxu0 0.0
      %596 = vmatprep.subr.mxu0 0.0
      %597 = vmatpush2.msra.mxu0 0.0
      %598 = vmatprep.subr.mxu0 0.0
      %599 = vmatpush2.msra.mxu0 0.0
      %600 = vmatprep.subr.mxu0 0.0
      %601 = vmatpush2.msra.mxu0 0.0
      %602 = vmatprep.subr.mxu0 0.0
      %603 = vmatpush2.msra.mxu0 0.0
      %604 = vmatprep.subr.mxu0 0.0
      %605 = vmatpush2.msra.mxu0 0.0
      %606 = vmatprep.subr.mxu0 0.0
      %607 = vmatpush2.msra.mxu0 0.0
      %608 = vmatprep.subr.mxu0 0.0
      %609 = vmatpush2.msra.mxu0 0.0
      %610 = vmatprep.subr.mxu0 0.0
      %611 = vmatpush2.msra.mxu0 0.0
      %612 = vmatprep.subr.mxu0 0.0
      %613 = vmatpush2.msra.mxu0 0.0
      %614 = vmatprep.subr.mxu0 0.0
      %615 = vmatpush2.msra.mxu0 0.0
      %616 = vmatprep.subr.mxu0 0.0
      %617 = vmatpush2.msra.mxu0 0.0
      %618 = vmatprep.subr.mxu0 0.0
      %619 = vmatpush2.msra.mxu0 0.0
      %620 = vmatprep.subr.mxu0 0.0
      %621 = vmatpush2.msra.mxu0 0.0
      %622 = vmatprep.mubr.f32.mxu0 0.0
      %623 = vmatmul.mubr.f32.gmra.mxu0 %v528
      %v624 = vpop.f32.mrf.mxu0
      %v625 = vadd.f32 %v509, %v624
      %v626 = vpop.f32.mrf.mxu0
      %v627 = vadd.f32 %v509, %v626
      %628 = vmatprep.mubr.f32.mxu0 0.0
      %629 = vmatmul.mubr.f32.gmra.mxu0 %v531
      %v630 = vpop.f32.mrf.mxu0
      %v631 = vadd.f32 %v514, %v630
      %v632 = vpop.f32.mrf.mxu0
      %v633 = vadd.f32 %v514, %v632
      %634 = vmatprep.mubr.f32.mxu0 0.0
      %635 = vmatmul.mubr.f32.gmra.mxu0 %v534
      %v636 = vpop.f32.mrf.mxu0
      %v637 = vadd.f32 %v519, %v636
      %v638 = vpop.f32.mrf.mxu0
      %v639 = vadd.f32 %v519, %v638
      %640 = vmatprep.mubr.f32.mxu0 0.0
      %641 = vmatmul.mubr.f32.gmra.mxu0 %v537
      %v642 = vpop.f32.mrf.mxu0
      %v643 = vadd.f32 %v524, %v642
      %v644 = vpop.f32.mrf.mxu0
      %v645 = vadd.f32 %v524, %v644
      %646 = vdwg.mxu0
      %647 = vmatprep.subr.mxu0 0.0
      %648 = vmatpush1.msra.mxu0 0.0
      %649 = vmatprep.subr.mxu0 0.0
      %650 = vmatpush1.msra.mxu0 0.0
      %651 = vmatprep.subr.mxu0 0.0
      %652 = vmatpush1.msra.mxu0 0.0
      %653 = vmatprep.subr.mxu0 0.0
      %654 = vmatpush1.msra.mxu0 0.0
      %655 = vmatprep.subr.mxu0 0.0
      %656 = vmatpush1.msra.mxu0 0.0
      %657 = vmatprep.subr.mxu0 0.0
      %658 = vmatpush1.msra.mxu0 0.0
      %659 = vmatprep.subr.mxu0 0.0
      %660 = vmatpush1.msra.mxu0 0.0
      %661 = vmatprep.subr.mxu0 0.0
      %662 = vmatpush1.msra.mxu0 0.0
      %663 = vmatprep.subr.mxu0 0.0
      %664 = vmatpush1.msra.mxu0 0.0
      %665 = vmatprep.subr.mxu0 0.0
      %666 = vmatpush1.msra.mxu0 0.0
      %667 = vmatprep.subr.mxu0 0.0
      %668 = vmatpush1.msra.mxu0 0.0
      %669 = vmatprep.subr.mxu0 %v550
      %670 = vmatpush1.msra.mxu0 %v547
      %671 = vmatprep.subr.mxu0 %v489
      %672 = vmatpush1.msra.mxu0 %v488
      %673 = vmatprep.subr.mxu0 %v483
      %674 = vmatpush1.msra.mxu0 %v482
      %675 = vmatprep.subr.mxu0 %v477
      %676 = vmatpush1.msra.mxu0 %v476
      %677 = vmatprep.subr.mxu0 %v471
      %678 = vmatpush1.msra.mxu0 %v470
      %679 = vmatprep.subr.mxu0 0.0
      %680 = vmatpush2.msra.mxu0 0.0
      %681 = vmatprep.subr.mxu0 0.0
      %682 = vmatpush2.msra.mxu0 0.0
      %683 = vmatprep.subr.mxu0 0.0
      %684 = vmatpush2.msra.mxu0 0.0
      %685 = vmatprep.subr.mxu0 0.0
      %686 = vmatpush2.msra.mxu0 0.0
      %687 = vmatprep.subr.mxu0 0.0
      %688 = vmatpush2.msra.mxu0 0.0
      %689 = vmatprep.subr.mxu0 0.0
      %690 = vmatpush2.msra.mxu0 0.0
      %691 = vmatprep.subr.mxu0 0.0
      %692 = vmatpush2.msra.mxu0 0.0
      %693 = vmatprep.subr.mxu0 0.0
      %694 = vmatpush2.msra.mxu0 0.0
      %695 = vmatprep.subr.mxu0 0.0
      %696 = vmatpush2.msra.mxu0 0.0
      %697 = vmatprep.subr.mxu0 0.0
      %698 = vmatpush2.msra.mxu0 0.0
      %699 = vmatprep.subr.mxu0 0.0
      %700 = vmatpush2.msra.mxu0 0.0
      %701 = vmatprep.subr.mxu0 0.0
      %702 = vmatpush2.msra.mxu0 0.0
      %703 = vmatprep.subr.mxu0 0.0
      %704 = vmatpush2.msra.mxu0 0.0
      %705 = vmatprep.subr.mxu0 0.0
      %706 = vmatpush2.msra.mxu0 0.0
      %707 = vmatprep.subr.mxu0 0.0
      %708 = vmatpush2.msra.mxu0 0.0
      %709 = vmatprep.subr.mxu0 0.0
      %710 = vmatpush2.msra.mxu0 0.0
      %711 = vmatprep.mubr.f32.mxu0 0.0
      %712 = vmatmul.mubr.f32.gmra.mxu0 %v528
      %v713 = vpop.f32.mrf.mxu0
      %v714 = vadd.f32 %v509, %v713
      %v715 = vpop.f32.mrf.mxu0
      %v716 = vadd.f32 %v509, %v715
      %717 = vmatprep.mubr.f32.mxu0 0.0
      %718 = vmatmul.mubr.f32.gmra.mxu0 %v531
      %v719 = vpop.f32.mrf.mxu0
      %v720 = vadd.f32 %v514, %v719
      %v721 = vpop.f32.mrf.mxu0
      %v722 = vadd.f32 %v514, %v721
      %723 = vmatprep.mubr.f32.mxu0 0.0
      %724 = vmatmul.mubr.f32.gmra.mxu0 %v534
      %v725 = vpop.f32.mrf.mxu0
      %v726 = vadd.f32 %v519, %v725
      %v727 = vpop.f32.mrf.mxu0
      %v728 = vadd.f32 %v519, %v727
      %729 = vmatprep.mubr.f32.mxu0 0.0
      %730 = vmatmul.mubr.f32.gmra.mxu0 %v537
      %v731 = vpop.f32.mrf.mxu0
      %v732 = vadd.f32 %v524, %v731
      %v733 = vpop.f32.mrf.mxu0
      %v734 = vadd.f32 %v524, %v733
      %735 = vdwg.mxu0
      %736 = vmatprep.subr.mxu0 0.0
      %737 = vmatpush1.msra.mxu0 0.0
      %738 = vmatprep.subr.mxu0 0.0
      %739 = vmatpush1.msra.mxu0 0.0
      %740 = vmatprep.subr.mxu0 0.0
      %741 = vmatpush1.msra.mxu0 0.0
      %742 = vmatprep.subr.mxu0 0.0
      %743 = vmatpush1.msra.mxu0 0.0
      %744 = vmatprep.subr.mxu0 0.0
      %745 = vmatpush1.msra.mxu0 0.0
      %746 = vmatprep.subr.mxu0 0.0
      %747 = vmatpush1.msra.mxu0 0.0
      %748 = vmatprep.subr.mxu0 0.0
      %749 = vmatpush1.msra.mxu0 0.0
      %750 = vmatprep.subr.mxu0 0.0
      %751 = vmatpush1.msra.mxu0 0.0
      %752 = vmatprep.subr.mxu0 0.0
      %753 = vmatpush1.msra.mxu0 0.0
      %754 = vmatprep.subr.mxu0 0.0
      %755 = vmatpush1.msra.mxu0 0.0
      %756 = vmatprep.subr.mxu0 0.0
      %757 = vmatpush1.msra.mxu0 0.0
      %758 = vmatprep.subr.mxu0 %v556
      %759 = vmatpush1.msra.mxu0 %v553
      %760 = vmatprep.subr.mxu0 %v491
      %761 = vmatpush1.msra.mxu0 %v490
      %762 = vmatprep.subr.mxu0 %v485
      %763 = vmatpush1.msra.mxu0 %v484
      %764 = vmatprep.subr.mxu0 %v479
      %765 = vmatpush1.msra.mxu0 %v478
      %766 = vmatprep.subr.mxu0 %v473
      %767 = vmatpush1.msra.mxu0 %v472
      %768 = vmatprep.subr.mxu0 0.0
      %769 = vmatpush2.msra.mxu0 0.0
      %770 = vmatprep.subr.mxu0 0.0
      %771 = vmatpush2.msra.mxu0 0.0
      %772 = vmatprep.subr.mxu0 0.0
      %773 = vmatpush2.msra.mxu0 0.0
      %774 = vmatprep.subr.mxu0 0.0
      %775 = vmatpush2.msra.mxu0 0.0
      %776 = vmatprep.subr.mxu0 0.0
      %777 = vmatpush2.msra.mxu0 0.0
      %778 = vmatprep.subr.mxu0 0.0
      %779 = vmatpush2.msra.mxu0 0.0
      %780 = vmatprep.subr.mxu0 0.0
      %781 = vmatpush2.msra.mxu0 0.0
      %782 = vmatprep.subr.mxu0 0.0
      %783 = vmatpush2.msra.mxu0 0.0
      %784 = vmatprep.subr.mxu0 0.0
      %785 = vmatpush2.msra.mxu0 0.0
      %786 = vmatprep.subr.mxu0 0.0
      %787 = vmatpush2.msra.mxu0 0.0
      %788 = vmatprep.subr.mxu0 0.0
      %789 = vmatpush2.msra.mxu0 0.0
      %790 = vmatprep.subr.mxu0 0.0
      %791 = vmatpush2.msra.mxu0 0.0
      %792 = vmatprep.subr.mxu0 0.0
      %793 = vmatpush2.msra.mxu0 0.0
      %794 = vmatprep.subr.mxu0 0.0
      %795 = vmatpush2.msra.mxu0 0.0
      %796 = vmatprep.subr.mxu0 0.0
      %797 = vmatpush2.msra.mxu0 0.0
      %798 = vmatprep.subr.mxu0 0.0
      %799 = vmatpush2.msra.mxu0 0.0
      %800 = vmatprep.mubr.f32.mxu0 0.0
      %801 = vmatmul.mubr.f32.gmra.mxu0 %v528
      %v802 = vpop.f32.mrf.mxu0
      %v803 = vadd.f32 %v509, %v802
      %v804 = vpop.f32.mrf.mxu0
      %v805 = vadd.f32 %v509, %v804
      %806 = vmatprep.mubr.f32.mxu0 0.0
      %807 = vmatmul.mubr.f32.gmra.mxu0 %v531
      %v808 = vpop.f32.mrf.mxu0
      %v809 = vadd.f32 %v514, %v808
      %v810 = vpop.f32.mrf.mxu0
      %v811 = vadd.f32 %v514, %v810
      %812 = vmatprep.mubr.f32.mxu0 0.0
      %813 = vmatmul.mubr.f32.gmra.mxu0 %v534
      %v814 = vpop.f32.mrf.mxu0
      %v815 = vadd.f32 %v519, %v814
      %v816 = vpop.f32.mrf.mxu0
      %v817 = vadd.f32 %v519, %v816
      %818 = vmatprep.mubr.f32.mxu0 0.0
      %819 = vmatmul.mubr.f32.gmra.mxu0 %v537
      %v820 = vpop.f32.mrf.mxu0
      %v821 = vadd.f32 %v524, %v820
      %v822 = vpop.f32.mrf.mxu0
      %v823 = vadd.f32 %v524, %v822
      %824 = vdwg.mxu0
      %v825 = vmax.f32 %v625, 0.0
      %v826 = vmax.f32 %v627, 0.0
      %v827 = vmax.f32 %v714, 0.0
      %v828 = vmax.f32 %v716, 0.0
      %v829 = vmax.f32 %v803, 0.0
      %v830 = vmax.f32 %v805, 0.0
      %v831 = vmax.f32 %v631, 0.0
      %v832 = vmax.f32 %v633, 0.0
      %v833 = vmax.f32 %v720, 0.0
      %v834 = vmax.f32 %v722, 0.0
      %v835 = vmax.f32 %v809, 0.0
      %v836 = vmax.f32 %v811, 0.0
      %v837 = vmax.f32 %v637, 0.0
      %v838 = vmax.f32 %v639, 0.0
      %v839 = vmax.f32 %v726, 0.0
      %v840 = vmax.f32 %v728, 0.0
      %v841 = vmax.f32 %v815, 0.0
      %v842 = vmax.f32 %v817, 0.0
      %v843 = vmax.f32 %v643, 0.0
      %v844 = vmax.f32 %v645, 0.0
      %v845 = vmax.f32 %v732, 0.0
      %v846 = vmax.f32 %v734, 0.0
      %v847 = vmax.f32 %v821, 0.0
      %v848 = vmax.f32 %v823, 0.0
      %v849 = vadd.f32 %v468, %v470
      %v850 = vadd.f32 %v469, %v471
      %v851 = vadd.f32 %v474, %v476
      %v852 = vadd.f32 %v475, %v477
      %v853 = vadd.f32 %v480, %v482
      %v854 = vadd.f32 %v481, %v483
      %v855 = vadd.f32 %v486, %v488
      %v856 = vadd.f32 %v487, %v489
      %v857 = vadd.f32 %v492, %v494
      %v858 = vadd.f32 %v493, %v495
      %v859 = vadd.f32 %v849, %v472
      %v860 = vadd.f32 %v850, %v473
      %v861 = vadd.f32 %v851, %v478
      %v862 = vadd.f32 %v852, %v479
      %v863 = vadd.f32 %v853, %v484
      %v864 = vadd.f32 %v854, %v485
      %v865 = vadd.f32 %v855, %v490
      %v866 = vadd.f32 %v856, %v491
      %v867 = vadd.f32 %v857, %v496
      %v868 = vadd.f32 %v858, %v497
      %v869 = vmul.f32 %v859, 0.33333334
      %v870 = vmul.f32 %v860, 0.33333334
      %v871 = vmul.f32 %v861, 0.33333334
      %v872 = vmul.f32 %v862, 0.33333334
      %v873 = vmul.f32 %v863, 0.33333334
      %v874 = vmul.f32 %v864, 0.33333334
      %v875 = vmul.f32 %v865, 0.33333334
      %v876 = vmul.f32 %v866, 0.33333334
      %v877 = vmul.f32 %v867, 0.33333334
      %v878 = vmul.f32 %v868, 0.33333334
      %v879 = vld [vmem:[%s4] sm:$0xff]
      %v880 = vld [vmem:[%s4 + $0x8] sm:$0xff]
      %v881 = vld [vmem:[%s4 + $0x10] sm:$0xff]
      %v882 = vld [vmem:[%s4 + $0x18] sm:$0xff]
      %v883 = vld [vmem:[%s5] sm:$0xff]
      %v884 = vld [vmem:[%s5 + $0x8] sm:$0xff]
      %v885 = vld [vmem:[%s5 + $0x10] sm:$0xff]
      %v886 = vld [vmem:[%s5 + $0x18] sm:$0xff]
      %888 = vset.pattern.permute.xlu0 0
      %889 = vperm.xlu0 %888, %v883
      %v890 = vpop.permute.xlu0 %889
      %893 = vset.pattern.permute.xlu0 0
      %894 = vperm.xlu0 %893, %v884
      %v895 = vpop.permute.xlu0 %894
      %898 = vset.pattern.permute.xlu0 0
      %899 = vperm.xlu0 %898, %v885
      %v900 = vpop.permute.xlu0 %899
      %903 = vset.pattern.permute.xlu0 0
      %904 = vperm.xlu0 %903, %v886
      %v905 = vpop.permute.xlu0 %904
      %v908 = vsel %vm526, %v879, 0
      %v911 = vsel %vm526, %v880, 0
      %v914 = vsel %vm526, %v881, 0
      %v917 = vsel %vm526, %v882, 0
      %v920 = vsel %vm539, %v877, 0
      %v923 = vsel %vm539, %v878, 0
      %925 = vmatprep.subr.mxu0 0.0
      %926 = vmatpush1.msra.mxu0 0.0
      %927 = vmatprep.subr.mxu0 0.0
      %928 = vmatpush1.msra.mxu0 0.0
      %929 = vmatprep.subr.mxu0 0.0
      %930 = vmatpush1.msra.mxu0 0.0
      %931 = vmatprep.subr.mxu0 0.0
      %932 = vmatpush1.msra.mxu0 0.0
      %933 = vmatprep.subr.mxu0 0.0
      %934 = vmatpush1.msra.mxu0 0.0
      %935 = vmatprep.subr.mxu0 0.0
      %936 = vmatpush1.msra.mxu0 0.0
      %937 = vmatprep.subr.mxu0 0.0
      %938 = vmatpush1.msra.mxu0 0.0
      %939 = vmatprep.subr.mxu0 0.0
      %940 = vmatpush1.msra.mxu0 0.0
      %941 = vmatprep.subr.mxu0 0.0
      %942 = vmatpush1.msra.mxu0 0.0
      %943 = vmatprep.subr.mxu0 0.0
      %944 = vmatpush1.msra.mxu0 0.0
      %945 = vmatprep.subr.mxu0 0.0
      %946 = vmatpush1.msra.mxu0 0.0
      %947 = vmatprep.subr.mxu0 %v923
      %948 = vmatpush1.msra.mxu0 %v920
      %949 = vmatprep.subr.mxu0 %v876
      %950 = vmatpush1.msra.mxu0 %v875
      %951 = vmatprep.subr.mxu0 %v874
      %952 = vmatpush1.msra.mxu0 %v873
      %953 = vmatprep.subr.mxu0 %v872
      %954 = vmatpush1.msra.mxu0 %v871
      %955 = vmatprep.subr.mxu0 %v870
      %956 = vmatpush1.msra.mxu0 %v869
      %957 = vmatprep.subr.mxu0 0.0
      %958 = vmatpush2.msra.mxu0 0.0
      %959 = vmatprep.subr.mxu0 0.0
      %960 = vmatpush2.msra.mxu0 0.0
      %961 = vmatprep.subr.mxu0 0.0
      %962 = vmatpush2.msra.mxu0 0.0
      %963 = vmatprep.subr.mxu0 0.0
      %964 = vmatpush2.msra.mxu0 0.0
      %965 = vmatprep.subr.mxu0 0.0
      %966 = vmatpush2.msra.mxu0 0.0
      %967 = vmatprep.subr.mxu0 0.0
      %968 = vmatpush2.msra.mxu0 0.0
      %969 = vmatprep.subr.mxu0 0.0
      %970 = vmatpush2.msra.mxu0 0.0
      %971 = vmatprep.subr.mxu0 0.0
      %972 = vmatpush2.msra.mxu0 0.0
      %973 = vmatprep.subr.mxu0 0.0
      %974 = vmatpush2.msra.mxu0 0.0
      %975 = vmatprep.subr.mxu0 0.0
      %976 = vmatpush2.msra.mxu0 0.0
      %977 = vmatprep.subr.mxu0 0.0
      %978 = vmatpush2.msra.mxu0 0.0
      %979 = vmatprep.subr.mxu0 0.0
      %980 = vmatpush2.msra.mxu0 0.0
      %981 = vmatprep.subr.mxu0 0.0
      %982 = vmatpush2.msra.mxu0 0.0
      %983 = vmatprep.subr.mxu0 0.0
      %984 = vmatpush2.msra.mxu0 0.0
      %985 = vmatprep.subr.mxu0 0.0
      %986 = vmatpush2.msra.mxu0 0.0
      %987 = vmatprep.subr.mxu0 0.0
      %988 = vmatpush2.msra.mxu0 0.0
      %989 = vmatprep.mubr.f32.mxu0 0.0
      %990 = vmatmul.mubr.f32.gmra.mxu0 %v908
      %v991 = vpop.f32.mrf.mxu0
      %v992 = vadd.f32 %v890, %v991
      %v993 = vpop.f32.mrf.mxu0
      %v994 = vadd.f32 %v890, %v993
      %995 = vmatprep.mubr.f32.mxu0 0.0
      %996 = vmatmul.mubr.f32.gmra.mxu0 %v911
      %v997 = vpop.f32.mrf.mxu0
      %v998 = vadd.f32 %v895, %v997
      %v999 = vpop.f32.mrf.mxu0
      %v1000 = vadd.f32 %v895, %v999
      %1001 = vmatprep.mubr.f32.mxu0 0.0
      %1002 = vmatmul.mubr.f32.gmra.mxu0 %v914
      %v1003 = vpop.f32.mrf.mxu0
      %v1004 = vadd.f32 %v900, %v1003
      %v1005 = vpop.f32.mrf.mxu0
      %v1006 = vadd.f32 %v900, %v1005
      %1007 = vmatprep.mubr.f32.mxu0 0.0
      %1008 = vmatmul.mubr.f32.gmra.mxu0 %v917
      %v1009 = vpop.f32.mrf.mxu0
      %v1010 = vadd.f32 %v905, %v1009
      %v1011 = vpop.f32.mrf.mxu0
      %v1012 = vadd.f32 %v905, %v1011
      %1013 = vdwg.mxu0
      %v1014 = vmax.f32 %v992, 0.0
      %v1015 = vmax.f32 %v994, 0.0
      %v1016 = vmax.f32 %v998, 0.0
      %v1017 = vmax.f32 %v1000, 0.0
      %v1018 = vmax.f32 %v1004, 0.0
      %v1019 = vmax.f32 %v1006, 0.0
      %v1020 = vmax.f32 %v1010, 0.0
      %v1021 = vmax.f32 %v1012, 0.0
      %v1022 = vadd.f32 %v1014, %v1015
      %1023 = vadd.xlane.f32.xlu0 %v1022
      %v1024 = vpop.xlane.xlu0 %1023
      %v1025 = vadd.f32 %v1016, %v1017
      %1026 = vadd.xlane.f32.xlu0 %v1025
      %v1027 = vpop.xlane.xlu0 %1026
      %v1028 = vadd.f32 %v1018, %v1019
      %1029 = vadd.xlane.f32.xlu0 %v1028
      %v1030 = vpop.xlane.xlu0 %1029
      %v1031 = vadd.f32 %v1020, %v1021
      %1032 = vadd.xlane.f32.xlu0 %v1031
      %v1033 = vpop.xlane.xlu0 %1032
      %v1034 = vrcp.pop 256.0
      %v1035 = vmul.f32 %v1024, %v1034
      %v1036 = vmul.f32 %v1027, %v1034
      %v1037 = vmul.f32 %v1030, %v1034
      %v1038 = vmul.f32 %v1033, %v1034
      %v1039 = vld [vmem:[%s1] sm:$0x77]
      %v1040 = vld [vmem:[%s1 + $0x8] sm:$0x77]
      %v1041 = vld [vmem:[%s1 + $0x10] sm:$0x77]
      %v1045 = vcombine.high %v1039, %v1039
      %v1046 = vcombine.high %v1040, %v1040
      %v1047 = vcombine.high %v1041, %v1041
      %1051 = vmatprep.subr.mxu0 0.0
      %1052 = vmatpush1.xpose.msra.mxu0 0.0
      %1053 = vmatprep.subr.mxu0 0.0
      %1054 = vmatpush1.xpose.msra.mxu0 0.0
      %1055 = vmatprep.subr.mxu0 0.0
      %1056 = vmatpush1.xpose.msra.mxu0 0.0
      %1057 = vmatprep.subr.mxu0 0.0
      %1058 = vmatpush1.xpose.msra.mxu0 0.0
      %1059 = vmatprep.subr.mxu0 0.0
      %1060 = vmatpush1.xpose.msra.mxu0 0.0
      %1061 = vmatprep.subr.mxu0 0.0
      %1062 = vmatpush1.xpose.msra.mxu0 0.0
      %1063 = vmatprep.subr.mxu0 0.0
      %1064 = vmatpush1.xpose.msra.mxu0 0.0
      %1065 = vmatprep.subr.mxu0 0.0
      %1066 = vmatpush1.xpose.msra.mxu0 0.0
      %1067 = vmatprep.subr.mxu0 0.0
      %1068 = vmatpush1.xpose.msra.mxu0 0.0
      %1069 = vmatprep.subr.mxu0 0.0
      %1070 = vmatpush1.xpose.msra.mxu0 0.0
      %1071 = vmatprep.subr.mxu0 0.0
      %1072 = vmatpush1.xpose.msra.mxu0 0.0
      %1073 = vmatprep.subr.mxu0 0.0
      %1074 = vmatpush1.xpose.msra.mxu0 0.0
      %1075 = vmatprep.subr.mxu0 0.0
      %1076 = vmatpush1.xpose.msra.mxu0 0.0
      %1077 = vmatprep.subr.mxu0 0.0
      %1078 = vmatpush1.xpose.msra.mxu0 0.0
      %1079 = vmatprep.subr.mxu0 0.0
      %1080 = vmatpush1.xpose.msra.mxu0 0.0
      %1081 = vmatprep.subr.mxu0 %v1045
      %1082 = vmatpush1.xpose.msra.mxu0 %v1039
      %1083 = vmatprep.subr.mxu0 0.0
      %1084 = vmatpush2.xpose.msra.mxu0 0.0
      %1085 = vmatprep.subr.mxu0 0.0
      %1086 = vmatpush2.xpose.msra.mxu0 0.0
      %1087 = vmatprep.subr.mxu0 0.0
      %1088 = vmatpush2.xpose.msra.mxu0 0.0
      %1089 = vmatprep.subr.mxu0 0.0
      %1090 = vmatpush2.xpose.msra.mxu0 0.0
      %1091 = vmatprep.subr.mxu0 0.0
      %1092 = vmatpush2.xpose.msra.mxu0 0.0
      %1093 = vmatprep.subr.mxu0 0.0
      %1094 = vmatpush2.xpose.msra.mxu0 0.0
      %1095 = vmatprep.subr.mxu0 0.0
      %1096 = vmatpush2.xpose.msra.mxu0 0.0
      %1097 = vmatprep.subr.mxu0 0.0
      %1098 = vmatpush2.xpose.msra.mxu0 0.0
      %1099 = vmatprep.subr.mxu0 0.0
      %1100 = vmatpush2.xpose.msra.mxu0 0.0
      %1101 = vmatprep.subr.mxu0 0.0
      %1102 = vmatpush2.xpose.msra.mxu0 0.0
      %1103 = vmatprep.subr.mxu0 0.0
      %1104 = vmatpush2.xpose.msra.mxu0 0.0
      %1105 = vmatprep.subr.mxu0 0.0
      %1106 = vmatpush2.xpose.msra.mxu0 0.0
      %1107 = vmatprep.subr.mxu0 0.0
      %1108 = vmatpush2.xpose.msra.mxu0 0.0
      %1109 = vmatprep.subr.mxu0 0.0
      %1110 = vmatpush2.xpose.msra.mxu0 0.0
      %1111 = vmatprep.subr.mxu0 0.0
      %1112 = vmatpush2.xpose.msra.mxu0 0.0
      %1113 = vmatprep.subr.mxu0 0.0
      %1114 = vmatpush2.xpose.msra.mxu0 0.0
      %1115 = vmatprep.mubr.f32.mxu0 %v826
      %1116 = vmatmul.mubr.f32.gmra.mxu0 %v825
      %v1117 = vpop.f32.mrf.mxu0
      %v1118 = vadd.f32 %v1035, %v1117
      %v1119 = vpop.f32.mrf.mxu0
      %1120 = vmatprep.mubr.f32.mxu0 %v832
      %1121 = vmatmul.mubr.f32.gmra.mxu0 %v831
      %v1122 = vpop.f32.mrf.mxu0
      %v1123 = vadd.f32 %v1036, %v1122
      %v1124 = vpop.f32.mrf.mxu0
      %1125 = vmatprep.mubr.f32.mxu0 %v838
      %1126 = vmatmul.mubr.f32.gmra.mxu0 %v837
      %v1127 = vpop.f32.mrf.mxu0
      %v1128 = vadd.f32 %v1037, %v1127
      %v1129 = vpop.f32.mrf.mxu0
      %1130 = vmatprep.mubr.f32.mxu0 %v844
      %1131 = vmatmul.mubr.f32.gmra.mxu0 %v843
      %v1132 = vpop.f32.mrf.mxu0
      %v1133 = vadd.f32 %v1038, %v1132
      %v1134 = vpop.f32.mrf.mxu0
      %1135 = vdwg.mxu0
      %1136 = vmatprep.subr.mxu0 0.0
      %1137 = vmatpush1.xpose.msra.mxu0 0.0
      %1138 = vmatprep.subr.mxu0 0.0
      %1139 = vmatpush1.xpose.msra.mxu0 0.0
      %1140 = vmatprep.subr.mxu0 0.0
      %1141 = vmatpush1.xpose.msra.mxu0 0.0
      %1142 = vmatprep.subr.mxu0 0.0
      %1143 = vmatpush1.xpose.msra.mxu0 0.0
      %1144 = vmatprep.subr.mxu0 0.0
      %1145 = vmatpush1.xpose.msra.mxu0 0.0
      %1146 = vmatprep.subr.mxu0 0.0
      %1147 = vmatpush1.xpose.msra.mxu0 0.0
      %1148 = vmatprep.subr.mxu0 0.0
      %1149 = vmatpush1.xpose.msra.mxu0 0.0
      %1150 = vmatprep.subr.mxu0 0.0
      %1151 = vmatpush1.xpose.msra.mxu0 0.0
      %1152 = vmatprep.subr.mxu0 0.0
      %1153 = vmatpush1.xpose.msra.mxu0 0.0
      %1154 = vmatprep.subr.mxu0 0.0
      %1155 = vmatpush1.xpose.msra.mxu0 0.0
      %1156 = vmatprep.subr.mxu0 0.0
      %1157 = vmatpush1.xpose.msra.mxu0 0.0
      %1158 = vmatprep.subr.mxu0 0.0
      %1159 = vmatpush1.xpose.msra.mxu0 0.0
      %1160 = vmatprep.subr.mxu0 0.0
      %1161 = vmatpush1.xpose.msra.mxu0 0.0
      %1162 = vmatprep.subr.mxu0 0.0
      %1163 = vmatpush1.xpose.msra.mxu0 0.0
      %1164 = vmatprep.subr.mxu0 0.0
      %1165 = vmatpush1.xpose.msra.mxu0 0.0
      %1166 = vmatprep.subr.mxu0 %v1046
      %1167 = vmatpush1.xpose.msra.mxu0 %v1040
      %1168 = vmatprep.subr.mxu0 0.0
      %1169 = vmatpush2.xpose.msra.mxu0 0.0
      %1170 = vmatprep.subr.mxu0 0.0
      %1171 = vmatpush2.xpose.msra.mxu0 0.0
      %1172 = vmatprep.subr.mxu0 0.0
      %1173 = vmatpush2.xpose.msra.mxu0 0.0
      %1174 = vmatprep.subr.mxu0 0.0
      %1175 = vmatpush2.xpose.msra.mxu0 0.0
      %1176 = vmatprep.subr.mxu0 0.0
      %1177 = vmatpush2.xpose.msra.mxu0 0.0
      %1178 = vmatprep.subr.mxu0 0.0
      %1179 = vmatpush2.xpose.msra.mxu0 0.0
      %1180 = vmatprep.subr.mxu0 0.0
      %1181 = vmatpush2.xpose.msra.mxu0 0.0
      %1182 = vmatprep.subr.mxu0 0.0
      %1183 = vmatpush2.xpose.msra.mxu0 0.0
      %1184 = vmatprep.subr.mxu0 0.0
      %1185 = vmatpush2.xpose.msra.mxu0 0.0
      %1186 = vmatprep.subr.mxu0 0.0
      %1187 = vmatpush2.xpose.msra.mxu0 0.0
      %1188 = vmatprep.subr.mxu0 0.0
      %1189 = vmatpush2.xpose.msra.mxu0 0.0
      %1190 = vmatprep.subr.mxu0 0.0
      %1191 = vmatpush2.xpose.msra.mxu0 0.0
      %1192 = vmatprep.subr.mxu0 0.0
      %1193 = vmatpush2.xpose.msra.mxu0 0.0
      %1194 = vmatprep.subr.mxu0 0.0
      %1195 = vmatpush2.xpose.msra.mxu0 0.0
      %1196 = vmatprep.subr.mxu0 0.0
      %1197 = vmatpush2.xpose.msra.mxu0 0.0
      %1198 = vmatprep.subr.mxu0 0.0
      %1199 = vmatpush2.xpose.msra.mxu0 0.0
      %1200 = vmatprep.mubr.f32.mxu0 %v828
      %1201 = vmatmul.mubr.f32.gmra.mxu0 %v827
      %v1202 = vpop.f32.mrf.mxu0
      %v1203 = vadd.f32 %v1118, %v1202
      %v1204 = vpop.f32.mrf.mxu0
      %1205 = vmatprep.mubr.f32.mxu0 %v834
      %1206 = vmatmul.mubr.f32.gmra.mxu0 %v833
      %v1207 = vpop.f32.mrf.mxu0
      %v1208 = vadd.f32 %v1123, %v1207
      %v1209 = vpop.f32.mrf.mxu0
      %1210 = vmatprep.mubr.f32.mxu0 %v840
      %1211 = vmatmul.mubr.f32.gmra.mxu0 %v839
      %v1212 = vpop.f32.mrf.mxu0
      %v1213 = vadd.f32 %v1128, %v1212
      %v1214 = vpop.f32.mrf.mxu0
      %1215 = vmatprep.mubr.f32.mxu0 %v846
      %1216 = vmatmul.mubr.f32.gmra.mxu0 %v845
      %v1217 = vpop.f32.mrf.mxu0
      %v1218 = vadd.f32 %v1133, %v1217
      %v1219 = vpop.f32.mrf.mxu0
      %1220 = vdwg.mxu0
      %1221 = vmatprep.subr.mxu0 0.0
      %1222 = vmatpush1.xpose.msra.mxu0 0.0
      %1223 = vmatprep.subr.mxu0 0.0
      %1224 = vmatpush1.xpose.msra.mxu0 0.0
      %1225 = vmatprep.subr.mxu0 0.0
      %1226 = vmatpush1.xpose.msra.mxu0 0.0
      %1227 = vmatprep.subr.mxu0 0.0
      %1228 = vmatpush1.xpose.msra.mxu0 0.0
      %1229 = vmatprep.subr.mxu0 0.0
      %1230 = vmatpush1.xpose.msra.mxu0 0.0
      %1231 = vmatprep.subr.mxu0 0.0
      %1232 = vmatpush1.xpose.msra.mxu0 0.0
      %1233 = vmatprep.subr.mxu0 0.0
      %1234 = vmatpush1.xpose.msra.mxu0 0.0
      %1235 = vmatprep.subr.mxu0 0.0
      %1236 = vmatpush1.xpose.msra.mxu0 0.0
      %1237 = vmatprep.subr.mxu0 0.0
      %1238 = vmatpush1.xpose.msra.mxu0 0.0
      %1239 = vmatprep.subr.mxu0 0.0
      %1240 = vmatpush1.xpose.msra.mxu0 0.0
      %1241 = vmatprep.subr.mxu0 0.0
      %1242 = vmatpush1.xpose.msra.mxu0 0.0
      %1243 = vmatprep.subr.mxu0 0.0
      %1244 = vmatpush1.xpose.msra.mxu0 0.0
      %1245 = vmatprep.subr.mxu0 0.0
      %1246 = vmatpush1.xpose.msra.mxu0 0.0
      %1247 = vmatprep.subr.mxu0 0.0
      %1248 = vmatpush1.xpose.msra.mxu0 0.0
      %1249 = vmatprep.subr.mxu0 0.0
      %1250 = vmatpush1.xpose.msra.mxu0 0.0
      %1251 = vmatprep.subr.mxu0 %v1047
      %1252 = vmatpush1.xpose.msra.mxu0 %v1041
      %1253 = vmatprep.subr.mxu0 0.0
      %1254 = vmatpush2.xpose.msra.mxu0 0.0
      %1255 = vmatprep.subr.mxu0 0.0
      %1256 = vmatpush2.xpose.msra.mxu0 0.0
      %1257 = vmatprep.subr.mxu0 0.0
      %1258 = vmatpush2.xpose.msra.mxu0 0.0
      %1259 = vmatprep.subr.mxu0 0.0
      %1260 = vmatpush2.xpose.msra.mxu0 0.0
      %1261 = vmatprep.subr.mxu0 0.0
      %1262 = vmatpush2.xpose.msra.mxu0 0.0
      %1263 = vmatprep.subr.mxu0 0.0
      %1264 = vmatpush2.xpose.msra.mxu0 0.0
      %1265 = vmatprep.subr.mxu0 0.0
      %1266 = vmatpush2.xpose.msra.mxu0 0.0
      %1267 = vmatprep.subr.mxu0 0.0
      %1268 = vmatpush2.xpose.msra.mxu0 0.0
      %1269 = vmatprep.subr.mxu0 0.0
      %1270 = vmatpush2.xpose.msra.mxu0 0.0
      %1271 = vmatprep.subr.mxu0 0.0
      %1272 = vmatpush2.xpose.msra.mxu0 0.0
      %1273 = vmatprep.subr.mxu0 0.0
      %1274 = vmatpush2.xpose.msra.mxu0 0.0
      %1275 = vmatprep.subr.mxu0 0.0
      %1276 = vmatpush2.xpose.msra.mxu0 0.0
      %1277 = vmatprep.subr.mxu0 0.0
      %1278 = vmatpush2.xpose.msra.mxu0 0.0
      %1279 = vmatprep.subr.mxu0 0.0
      %1280 = vmatpush2.xpose.msra.mxu0 0.0
      %1281 = vmatprep.subr.mxu0 0.0
      %1282 = vmatpush2.xpose.msra.mxu0 0.0
      %1283 = vmatprep.subr.mxu0 0.0
      %1284 = vmatpush2.xpose.msra.mxu0 0.0
      %1285 = vmatprep.mubr.f32.mxu0 %v830
      %1286 = vmatmul.mubr.f32.gmra.mxu0 %v829
      %v1287 = vpop.f32.mrf.mxu0
      %v1288 = vadd.f32 %v1203, %v1287
      %v1289 = vpop.f32.mrf.mxu0
      %1290 = vmatprep.mubr.f32.mxu0 %v836
      %1291 = vmatmul.mubr.f32.gmra.mxu0 %v835
      %v1292 = vpop.f32.mrf.mxu0
      %v1293 = vadd.f32 %v1208, %v1292
      %v1294 = vpop.f32.mrf.mxu0
      %1295 = vmatprep.mubr.f32.mxu0 %v842
      %1296 = vmatmul.mubr.f32.gmra.mxu0 %v841
      %v1297 = vpop.f32.mrf.mxu0
      %v1298 = vadd.f32 %v1213, %v1297
      %v1299 = vpop.f32.mrf.mxu0
      %1300 = vmatprep.mubr.f32.mxu0 %v848
      %1301 = vmatmul.mubr.f32.gmra.mxu0 %v847
      %v1302 = vpop.f32.mrf.mxu0
      %v1303 = vadd.f32 %v1218, %v1302
      %v1304 = vpop.f32.mrf.mxu0
      %1305 = vdwg.mxu0
      %vm1306 = vcmask 23552
      %v1307 = vsel %vm1306, %v1288, 0.0
      %1308 = vadd.xlane.f32.xlu0 %v1307
      %v1309 = vpop.xlane.xlu0 %1308
      %v1310 = vsel %vm1306, %v1293, 0.0
      %1311 = vadd.xlane.f32.xlu0 %v1310
      %v1312 = vpop.xlane.xlu0 %1311
      %v1313 = vsel %vm1306, %v1298, 0.0
      %1314 = vadd.xlane.f32.xlu0 %v1313
      %v1315 = vpop.xlane.xlu0 %1314
      %v1316 = vsel %vm1306, %v1303, 0.0
      %1317 = vadd.xlane.f32.xlu0 %v1316
      %v1318 = vpop.xlane.xlu0 %1317
      %v1319 = vrcp.pop 3.0
      %v1320 = vmul.f32 %v1309, %v1319
      %v1321 = vmul.f32 %v1312, %v1319
      %v1322 = vmul.f32 %v1315, %v1319
      %v1323 = vmul.f32 %v1318, %v1319
      %v1324 = vld [vmem:[%s6] sm:$0xff]
      %v1325 = vld [vmem:[%s6 + $0x8] sm:$0xff]
      %v1326 = vld [vmem:[%s6 + $0x10] sm:$0xff]
      %v1327 = vld [vmem:[%s6 + $0x18] sm:$0xff]
      %v1328 = vld [vmem:[%s7] sm:$0xff]
      %v1329 = vld [vmem:[%s7 + $0x8] sm:$0xff]
      %v1330 = vld [vmem:[%s7 + $0x10] sm:$0xff]
      %v1331 = vld [vmem:[%s7 + $0x18] sm:$0xff]
      %1333 = vset.pattern.permute.xlu0 0
      %1334 = vperm.xlu0 %1333, %v1328
      %v1335 = vpop.permute.xlu0 %1334
      %1338 = vset.pattern.permute.xlu0 0
      %1339 = vperm.xlu0 %1338, %v1329
      %v1340 = vpop.permute.xlu0 %1339
      %1343 = vset.pattern.permute.xlu0 0
      %1344 = vperm.xlu0 %1343, %v1330
      %v1345 = vpop.permute.xlu0 %1344
      %1348 = vset.pattern.permute.xlu0 0
      %1349 = vperm.xlu0 %1348, %v1331
      %v1350 = vpop.permute.xlu0 %1349
      %vm1352 = vcmask 261120
      %v1354 = vsel %vm1352, %v1324, 0
      %v1357 = vsel %vm1352, %v1325, 0
      %v1360 = vsel %vm1352, %v1326, 0
      %v1363 = vsel %vm1352, %v1327, 0
      %1365 = vmatprep.subr.mxu0 0.0
      %1366 = vmatpush1.msra.mxu0 0.0
      %1367 = vmatprep.subr.mxu0 0.0
      %1368 = vmatpush1.msra.mxu0 0.0
      %1369 = vmatprep.subr.mxu0 0.0
      %1370 = vmatpush1.msra.mxu0 0.0
      %1371 = vmatprep.subr.mxu0 0.0
      %1372 = vmatpush1.msra.mxu0 0.0
      %1373 = vmatprep.subr.mxu0 0.0
      %1374 = vmatpush1.msra.mxu0 0.0
      %1375 = vmatprep.subr.mxu0 0.0
      %1376 = vmatpush1.msra.mxu0 0.0
      %1377 = vmatprep.subr.mxu0 0.0
      %1378 = vmatpush1.msra.mxu0 0.0
      %1379 = vmatprep.subr.mxu0 0.0
      %1380 = vmatpush1.msra.mxu0 0.0
      %1381 = vmatprep.subr.mxu0 0.0
      %1382 = vmatpush1.msra.mxu0 0.0
      %1383 = vmatprep.subr.mxu0 0.0
      %1384 = vmatpush1.msra.mxu0 0.0
      %1385 = vmatprep.subr.mxu0 0.0
      %1386 = vmatpush1.msra.mxu0 0.0
      %1387 = vmatprep.subr.mxu0 0.0
      %1388 = vmatpush1.msra.mxu0 0.0
      %1389 = vmatprep.subr.mxu0 0.0
      %1390 = vmatpush1.msra.mxu0 %v1303
      %1391 = vmatprep.subr.mxu0 0.0
      %1392 = vmatpush1.msra.mxu0 %v1298
      %1393 = vmatprep.subr.mxu0 0.0
      %1394 = vmatpush1.msra.mxu0 %v1293
      %1395 = vmatprep.subr.mxu0 0.0
      %1396 = vmatpush1.msra.mxu0 %v1288
      %1397 = vmatprep.subr.mxu0 0.0
      %1398 = vmatpush2.msra.mxu0 0.0
      %1399 = vmatprep.subr.mxu0 0.0
      %1400 = vmatpush2.msra.mxu0 0.0
      %1401 = vmatprep.subr.mxu0 0.0
      %1402 = vmatpush2.msra.mxu0 0.0
      %1403 = vmatprep.subr.mxu0 0.0
      %1404 = vmatpush2.msra.mxu0 0.0
      %1405 = vmatprep.subr.mxu0 0.0
      %1406 = vmatpush2.msra.mxu0 0.0
      %1407 = vmatprep.subr.mxu0 0.0
      %1408 = vmatpush2.msra.mxu0 0.0
      %1409 = vmatprep.subr.mxu0 0.0
      %1410 = vmatpush2.msra.mxu0 0.0
      %1411 = vmatprep.subr.mxu0 0.0
      %1412 = vmatpush2.msra.mxu0 0.0
      %1413 = vmatprep.subr.mxu0 0.0
      %1414 = vmatpush2.msra.mxu0 0.0
      %1415 = vmatprep.subr.mxu0 0.0
      %1416 = vmatpush2.msra.mxu0 0.0
      %1417 = vmatprep.subr.mxu0 0.0
      %1418 = vmatpush2.msra.mxu0 0.0
      %1419 = vmatprep.subr.mxu0 0.0
      %1420 = vmatpush2.msra.mxu0 0.0
      %1421 = vmatprep.subr.mxu0 0.0
      %1422 = vmatpush2.msra.mxu0 0.0
      %1423 = vmatprep.subr.mxu0 0.0
      %1424 = vmatpush2.msra.mxu0 0.0
      %1425 = vmatprep.subr.mxu0 0.0
      %1426 = vmatpush2.msra.mxu0 0.0
      %1427 = vmatprep.subr.mxu0 0.0
      %1428 = vmatpush2.msra.mxu0 0.0
      %1429 = vmatprep.mubr.f32.mxu0 0.0
      %1430 = vmatmul.mubr.f32.gmra.mxu0 %v1354
      %v1431 = vpop.f32.mrf.mxu0
      %v1432 = vadd.f32 %v1335, %v1431
      %v1433 = vpop.f32.mrf.mxu0
      %1434 = vmatprep.mubr.f32.mxu0 0.0
      %1435 = vmatmul.mubr.f32.gmra.mxu0 %v1357
      %v1436 = vpop.f32.mrf.mxu0
      %v1437 = vadd.f32 %v1340, %v1436
      %v1438 = vpop.f32.mrf.mxu0
      %1439 = vmatprep.mubr.f32.mxu0 0.0
      %1440 = vmatmul.mubr.f32.gmra.mxu0 %v1360
      %v1441 = vpop.f32.mrf.mxu0
      %v1442 = vadd.f32 %v1345, %v1441
      %v1443 = vpop.f32.mrf.mxu0
      %1444 = vmatprep.mubr.f32.mxu0 0.0
      %1445 = vmatmul.mubr.f32.gmra.mxu0 %v1363
      %v1446 = vpop.f32.mrf.mxu0
      %v1447 = vadd.f32 %v1350, %v1446
      %v1448 = vpop.f32.mrf.mxu0
      %1449 = vdwg.mxu0
      %v1450 = vld [vmem:[%s8] sm:$0xff]
      %v1451 = vld [vmem:[%s8 + $0x8] sm:$0xff]
      %v1452 = vld [vmem:[%s8 + $0x10] sm:$0xff]
      %v1453 = vld [vmem:[%s8 + $0x18] sm:$0xff]
      %v1454 = vld [vmem:[%s9] sm:$0xff]
      %v1455 = vld [vmem:[%s9 + $0x8] sm:$0xff]
      %v1456 = vld [vmem:[%s9 + $0x10] sm:$0xff]
      %v1457 = vld [vmem:[%s9 + $0x18] sm:$0xff]
      %v1459 = vsel %vm1352, %v1450, 0
      %v1462 = vsel %vm1352, %v1451, 0
      %v1465 = vsel %vm1352, %v1452, 0
      %v1468 = vsel %vm1352, %v1453, 0
      %1470 = vmatprep.subr.mxu0 0.0
      %1471 = vmatpush1.msra.mxu0 0.0
      %1472 = vmatprep.subr.mxu0 0.0
      %1473 = vmatpush1.msra.mxu0 0.0
      %1474 = vmatprep.subr.mxu0 0.0
      %1475 = vmatpush1.msra.mxu0 0.0
      %1476 = vmatprep.subr.mxu0 0.0
      %1477 = vmatpush1.msra.mxu0 0.0
      %1478 = vmatprep.subr.mxu0 0.0
      %1479 = vmatpush1.msra.mxu0 0.0
      %1480 = vmatprep.subr.mxu0 0.0
      %1481 = vmatpush1.msra.mxu0 0.0
      %1482 = vmatprep.subr.mxu0 0.0
      %1483 = vmatpush1.msra.mxu0 0.0
      %1484 = vmatprep.subr.mxu0 0.0
      %1485 = vmatpush1.msra.mxu0 0.0
      %1486 = vmatprep.subr.mxu0 0.0
      %1487 = vmatpush1.msra.mxu0 0.0
      %1488 = vmatprep.subr.mxu0 0.0
      %1489 = vmatpush1.msra.mxu0 0.0
      %1490 = vmatprep.subr.mxu0 0.0
      %1491 = vmatpush1.msra.mxu0 0.0
      %1492 = vmatprep.subr.mxu0 0.0
      %1493 = vmatpush1.msra.mxu0 0.0
      %1494 = vmatprep.subr.mxu0 0.0
      %1495 = vmatpush1.msra.mxu0 %v1323
      %1496 = vmatprep.subr.mxu0 0.0
      %1497 = vmatpush1.msra.mxu0 %v1322
      %1498 = vmatprep.subr.mxu0 0.0
      %1499 = vmatpush1.msra.mxu0 %v1321
      %1500 = vmatprep.subr.mxu0 0.0
      %1501 = vmatpush1.msra.mxu0 %v1320
      %1502 = vmatprep.subr.mxu0 0.0
      %1503 = vmatpush2.msra.mxu0 0.0
      %1504 = vmatprep.subr.mxu0 0.0
      %1505 = vmatpush2.msra.mxu0 0.0
      %1506 = vmatprep.subr.mxu0 0.0
      %1507 = vmatpush2.msra.mxu0 0.0
      %1508 = vmatprep.subr.mxu0 0.0
      %1509 = vmatpush2.msra.mxu0 0.0
      %1510 = vmatprep.subr.mxu0 0.0
      %1511 = vmatpush2.msra.mxu0 0.0
      %1512 = vmatprep.subr.mxu0 0.0
      %1513 = vmatpush2.msra.mxu0 0.0
      %1514 = vmatprep.subr.mxu0 0.0
      %1515 = vmatpush2.msra.mxu0 0.0
      %1516 = vmatprep.subr.mxu0 0.0
      %1517 = vmatpush2.msra.mxu0 0.0
      %1518 = vmatprep.subr.mxu0 0.0
      %1519 = vmatpush2.msra.mxu0 0.0
      %1520 = vmatprep.subr.mxu0 0.0
      %1521 = vmatpush2.msra.mxu0 0.0
      %1522 = vmatprep.subr.mxu0 0.0
      %1523 = vmatpush2.msra.mxu0 0.0
      %1524 = vmatprep.subr.mxu0 0.0
      %1525 = vmatpush2.msra.mxu0 0.0
      %1526 = vmatprep.subr.mxu0 0.0
      %1527 = vmatpush2.msra.mxu0 0.0
      %1528 = vmatprep.subr.mxu0 0.0
      %1529 = vmatpush2.msra.mxu0 0.0
      %1530 = vmatprep.subr.mxu0 0.0
      %1531 = vmatpush2.msra.mxu0 0.0
      %1532 = vmatprep.subr.mxu0 0.0
      %1533 = vmatpush2.msra.mxu0 0.0
      %1534 = vmatprep.mubr.f32.mxu0 0.0
      %1535 = vmatmul.mubr.f32.gmra.mxu0 %v1459
      %v1536 = vpop.f32.mrf.mxu0
      %v1537 = vadd.f32 %v1454, %v1536
      %v1538 = vpop.f32.mrf.mxu0
      %1539 = vmatprep.mubr.f32.mxu0 0.0
      %1540 = vmatmul.mubr.f32.gmra.mxu0 %v1462
      %v1541 = vpop.f32.mrf.mxu0
      %v1542 = vadd.f32 %v1455, %v1541
      %v1543 = vpop.f32.mrf.mxu0
      %1544 = vmatprep.mubr.f32.mxu0 0.0
      %1545 = vmatmul.mubr.f32.gmra.mxu0 %v1465
      %v1546 = vpop.f32.mrf.mxu0
      %v1547 = vadd.f32 %v1456, %v1546
      %v1548 = vpop.f32.mrf.mxu0
      %1549 = vmatprep.mubr.f32.mxu0 0.0
      %1550 = vmatmul.mubr.f32.gmra.mxu0 %v1468
      %v1551 = vpop.f32.mrf.mxu0
      %v1552 = vadd.f32 %v1457, %v1551
      %v1553 = vpop.f32.mrf.mxu0
      %1554 = vdwg.mxu0
      %1556 = vset.pattern.permute.xlu0 0
      %1557 = vperm.xlu0 %1556, %v1537
      %v1558 = vpop.permute.xlu0 %1557
      %1561 = vset.pattern.permute.xlu0 0
      %1562 = vperm.xlu0 %1561, %v1542
      %v1563 = vpop.permute.xlu0 %1562
      %1566 = vset.pattern.permute.xlu0 0
      %1567 = vperm.xlu0 %1566, %v1547
      %v1568 = vpop.permute.xlu0 %1567
      %1571 = vset.pattern.permute.xlu0 0
      %1572 = vperm.xlu0 %1571, %v1552
      %v1573 = vpop.permute.xlu0 %1572
      %v1575 = vadd.f32 %v1432, %v1558
      %v1576 = vadd.f32 %v1437, %v1563
      %v1577 = vadd.f32 %v1442, %v1568
      %v1578 = vadd.f32 %v1447, %v1573
      %v1579 = vmax.f32 %v1575, 0.0
      %v1580 = vmax.f32 %v1576, 0.0
      %v1581 = vmax.f32 %v1577, 0.0
      %v1582 = vmax.f32 %v1578, 0.0
      %v1583 = vsel %vm1306, %v1579, 0.0
      %1584 = vadd.xlane.f32.xlu0 %v1583
      %v1585 = vpop.xlane.xlu0 %1584
      %v1586 = vsel %vm1306, %v1580, 0.0
      %1587 = vadd.xlane.f32.xlu0 %v1586
      %v1588 = vpop.xlane.xlu0 %1587
      %v1589 = vsel %vm1306, %v1581, 0.0
      %1590 = vadd.xlane.f32.xlu0 %v1589
      %v1591 = vpop.xlane.xlu0 %1590
      %v1592 = vsel %vm1306, %v1582, 0.0
      %1593 = vadd.xlane.f32.xlu0 %v1592
      %v1594 = vpop.xlane.xlu0 %1593
      %v1595 = vld [vmem:[%s10] sm:$0xff]
      %v1596 = vld [vmem:[%s10 + $0x8] sm:$0xff]
      %v1597 = vld [vmem:[%s10 + $0x10] sm:$0xff]
      %v1598 = vld [vmem:[%s10 + $0x18] sm:$0xff]
      %v1599 = vld [vmem:[%s11] sm:$0xff]
      %v1600 = vld [vmem:[%s11 + $0x8] sm:$0xff]
      %v1601 = vld [vmem:[%s11 + $0x10] sm:$0xff]
      %v1602 = vld [vmem:[%s11 + $0x18] sm:$0xff]
      %v1604 = vsel %vm1352, %v1595, 0
      %v1607 = vsel %vm1352, %v1596, 0
      %v1610 = vsel %vm1352, %v1597, 0
      %v1613 = vsel %vm1352, %v1598, 0
      %1615 = vmatprep.subr.mxu0 0.0
      %1616 = vmatpush1.msra.mxu0 0.0
      %1617 = vmatprep.subr.mxu0 0.0
      %1618 = vmatpush1.msra.mxu0 0.0
      %1619 = vmatprep.subr.mxu0 0.0
      %1620 = vmatpush1.msra.mxu0 0.0
      %1621 = vmatprep.subr.mxu0 0.0
      %1622 = vmatpush1.msra.mxu0 0.0
      %1623 = vmatprep.subr.mxu0 0.0
      %1624 = vmatpush1.msra.mxu0 0.0
      %1625 = vmatprep.subr.mxu0 0.0
      %1626 = vmatpush1.msra.mxu0 0.0
      %1627 = vmatprep.subr.mxu0 0.0
      %1628 = vmatpush1.msra.mxu0 0.0
      %1629 = vmatprep.subr.mxu0 0.0
      %1630 = vmatpush1.msra.mxu0 0.0
      %1631 = vmatprep.subr.mxu0 0.0
      %1632 = vmatpush1.msra.mxu0 0.0
      %1633 = vmatprep.subr.mxu0 0.0
      %1634 = vmatpush1.msra.mxu0 0.0
      %1635 = vmatprep.subr.mxu0 0.0
      %1636 = vmatpush1.msra.mxu0 0.0
      %1637 = vmatprep.subr.mxu0 0.0
      %1638 = vmatpush1.msra.mxu0 0.0
      %1639 = vmatprep.subr.mxu0 0.0
      %1640 = vmatpush1.msra.mxu0 %v1594
      %1641 = vmatprep.subr.mxu0 0.0
      %1642 = vmatpush1.msra.mxu0 %v1591
      %1643 = vmatprep.subr.mxu0 0.0
      %1644 = vmatpush1.msra.mxu0 %v1588
      %1645 = vmatprep.subr.mxu0 0.0
      %1646 = vmatpush1.msra.mxu0 %v1585
      %1647 = vmatprep.subr.mxu0 0.0
      %1648 = vmatpush2.msra.mxu0 0.0
      %1649 = vmatprep.subr.mxu0 0.0
      %1650 = vmatpush2.msra.mxu0 0.0
      %1651 = vmatprep.subr.mxu0 0.0
      %1652 = vmatpush2.msra.mxu0 0.0
      %1653 = vmatprep.subr.mxu0 0.0
      %1654 = vmatpush2.msra.mxu0 0.0
      %1655 = vmatprep.subr.mxu0 0.0
      %1656 = vmatpush2.msra.mxu0 0.0
      %1657 = vmatprep.subr.mxu0 0.0
      %1658 = vmatpush2.msra.mxu0 0.0
      %1659 = vmatprep.subr.mxu0 0.0
      %1660 = vmatpush2.msra.mxu0 0.0
      %1661 = vmatprep.subr.mxu0 0.0
      %1662 = vmatpush2.msra.mxu0 0.0
      %1663 = vmatprep.subr.mxu0 0.0
      %1664 = vmatpush2.msra.mxu0 0.0
      %1665 = vmatprep.subr.mxu0 0.0
      %1666 = vmatpush2.msra.mxu0 0.0
      %1667 = vmatprep.subr.mxu0 0.0
      %1668 = vmatpush2.msra.mxu0 0.0
      %1669 = vmatprep.subr.mxu0 0.0
      %1670 = vmatpush2.msra.mxu0 0.0
      %1671 = vmatprep.subr.mxu0 0.0
      %1672 = vmatpush2.msra.mxu0 0.0
      %1673 = vmatprep.subr.mxu0 0.0
      %1674 = vmatpush2.msra.mxu0 0.0
      %1675 = vmatprep.subr.mxu0 0.0
      %1676 = vmatpush2.msra.mxu0 0.0
      %1677 = vmatprep.subr.mxu0 0.0
      %1678 = vmatpush2.msra.mxu0 0.0
      %1679 = vmatprep.mubr.f32.mxu0 0.0
      %1680 = vmatmul.mubr.f32.gmra.mxu0 %v1604
      %v1681 = vpop.f32.mrf.mxu0
      %v1682 = vadd.f32 %v1599, %v1681
      %v1683 = vpop.f32.mrf.mxu0
      %1684 = vmatprep.mubr.f32.mxu0 0.0
      %1685 = vmatmul.mubr.f32.gmra.mxu0 %v1607
      %v1686 = vpop.f32.mrf.mxu0
      %v1687 = vadd.f32 %v1600, %v1686
      %v1688 = vpop.f32.mrf.mxu0
      %1689 = vmatprep.mubr.f32.mxu0 0.0
      %1690 = vmatmul.mubr.f32.gmra.mxu0 %v1610
      %v1691 = vpop.f32.mrf.mxu0
      %v1692 = vadd.f32 %v1601, %v1691
      %v1693 = vpop.f32.mrf.mxu0
      %1694 = vmatprep.mubr.f32.mxu0 0.0
      %1695 = vmatmul.mubr.f32.gmra.mxu0 %v1613
      %v1696 = vpop.f32.mrf.mxu0
      %v1697 = vadd.f32 %v1602, %v1696
      %v1698 = vpop.f32.mrf.mxu0
      %1699 = vdwg.mxu0
      %v1700 = vmax.f32 %v1682, 0.0
      %v1701 = vmax.f32 %v1687, 0.0
      %v1702 = vmax.f32 %v1692, 0.0
      %v1703 = vmax.f32 %v1697, 0.0
      %v1704 = vld [vmem:[%s12] sm:$0xff]
      %v1705 = vld [vmem:[%s12 + $0x8] sm:$0x3]
      %v1706 = vld [vmem:[%s13] sm:$0xff]
      %v1707 = vld [vmem:[%s13 + $0x8] sm:$0x3]
      %v1709 = vsel %vm1352, %v1704, 0
      %v1712 = vsel %vm1352, %v1705, 0
      %1714 = vmatprep.subr.mxu0 0.0
      %1715 = vmatpush1.msra.mxu0 0.0
      %1716 = vmatprep.subr.mxu0 0.0
      %1717 = vmatpush1.msra.mxu0 0.0
      %1718 = vmatprep.subr.mxu0 0.0
      %1719 = vmatpush1.msra.mxu0 0.0
      %1720 = vmatprep.subr.mxu0 0.0
      %1721 = vmatpush1.msra.mxu0 0.0
      %1722 = vmatprep.subr.mxu0 0.0
      %1723 = vmatpush1.msra.mxu0 0.0
      %1724 = vmatprep.subr.mxu0 0.0
      %1725 = vmatpush1.msra.mxu0 0.0
      %1726 = vmatprep.subr.mxu0 0.0
      %1727 = vmatpush1.msra.mxu0 0.0
      %1728 = vmatprep.subr.mxu0 0.0
      %1729 = vmatpush1.msra.mxu0 0.0
      %1730 = vmatprep.subr.mxu0 0.0
      %1731 = vmatpush1.msra.mxu0 0.0
      %1732 = vmatprep.subr.mxu0 0.0
      %1733 = vmatpush1.msra.mxu0 0.0
      %1734 = vmatprep.subr.mxu0 0.0
      %1735 = vmatpush1.msra.mxu0 0.0
      %1736 = vmatprep.subr.mxu0 0.0
      %1737 = vmatpush1.msra.mxu0 0.0
      %1738 = vmatprep.subr.mxu0 0.0
      %1739 = vmatpush1.msra.mxu0 %v1703
      %1740 = vmatprep.subr.mxu0 0.0
      %1741 = vmatpush1.msra.mxu0 %v1702
      %1742 = vmatprep.subr.mxu0 0.0
      %1743 = vmatpush1.msra.mxu0 %v1701
      %1744 = vmatprep.subr.mxu0 0.0
      %1745 = vmatpush1.msra.mxu0 %v1700
      %1746 = vmatprep.subr.mxu0 0.0
      %1747 = vmatpush2.msra.mxu0 0.0
      %1748 = vmatprep.subr.mxu0 0.0
      %1749 = vmatpush2.msra.mxu0 0.0
      %1750 = vmatprep.subr.mxu0 0.0
      %1751 = vmatpush2.msra.mxu0 0.0
      %1752 = vmatprep.subr.mxu0 0.0
      %1753 = vmatpush2.msra.mxu0 0.0
      %1754 = vmatprep.subr.mxu0 0.0
      %1755 = vmatpush2.msra.mxu0 0.0
      %1756 = vmatprep.subr.mxu0 0.0
      %1757 = vmatpush2.msra.mxu0 0.0
      %1758 = vmatprep.subr.mxu0 0.0
      %1759 = vmatpush2.msra.mxu0 0.0
      %1760 = vmatprep.subr.mxu0 0.0
      %1761 = vmatpush2.msra.mxu0 0.0
      %1762 = vmatprep.subr.mxu0 0.0
      %1763 = vmatpush2.msra.mxu0 0.0
      %1764 = vmatprep.subr.mxu0 0.0
      %1765 = vmatpush2.msra.mxu0 0.0
      %1766 = vmatprep.subr.mxu0 0.0
      %1767 = vmatpush2.msra.mxu0 0.0
      %1768 = vmatprep.subr.mxu0 0.0
      %1769 = vmatpush2.msra.mxu0 0.0
      %1770 = vmatprep.subr.mxu0 0.0
      %1771 = vmatpush2.msra.mxu0 0.0
      %1772 = vmatprep.subr.mxu0 0.0
      %1773 = vmatpush2.msra.mxu0 0.0
      %1774 = vmatprep.subr.mxu0 0.0
      %1775 = vmatpush2.msra.mxu0 0.0
      %1776 = vmatprep.subr.mxu0 0.0
      %1777 = vmatpush2.msra.mxu0 0.0
      %1778 = vmatprep.mubr.f32.mxu0 0.0
      %1779 = vmatmul.mubr.f32.gmra.mxu0 %v1709
      %v1780 = vpop.f32.mrf.mxu0
      %v1781 = vadd.f32 %v1706, %v1780
      %v1782 = vpop.f32.mrf.mxu0
      %1783 = vmatprep.mubr.f32.mxu0 0.0
      %1784 = vmatmul.mubr.f32.gmra.mxu0 %v1712
      %v1785 = vpop.f32.mrf.mxu0
      %v1786 = vadd.f32 %v1707, %v1785
      %v1787 = vpop.f32.mrf.mxu0
      %1788 = vdwg.mxu0
      %vm1789 = vcmask 7168
      %1790 = vst.msk [vmem:[%s467] sm:$0xff] %vm1789, %v1781
      %vm1791 = vcmask 1024
      %1792 = vst.msk [vmem:[%s467 + $0x8] sm:$0x3] %vm1791, %v1786
      %p1793 = scmp.lt.s32.totalorder %s25, 1
      %s1794 = scalar_select %p1793, %s25, 1
      %s1795 = smul.addr %s1794, 2
      %s1796 = smul.addr %s1795, 8
      %s1797 = scalar_lea.vmem %s14, %s1796
      // Predicated region
      $region77: #{geminn_forward.1} parent=75 // pred_check
        %p1798 = pneg %p342
      $region78: #{geminn_forward.1} parent=75 // pred_check_branch
        %1800 = sbr.rel (%p1798) target = $region80
      $region79: #{geminn_forward.1} parent=75 // pred_region
        _
      $region80: #{geminn_forward.1} parent=75 // pred_fallthru
        _
    $region76: #{geminn_forward.1} parent=5 // pred_fallthru
      _
    %p1801 = scmp.le.s32.totalorder 2, %s20
    // Predicated region
    $region81: #{geminn_forward.1} parent=5 // pred_check
      %p1802 = pneg %p1801
    $region82: #{geminn_forward.1} parent=5 // pred_check_branch
      %1804 = sbr.rel (%p1802) target = $region84
    $region83: #{geminn_forward.1} parent=5 // pred_region
      %s1805 = ssub.s32 %s20, 2
      // Predicated region
      $region85: #{geminn_forward.1} parent=83 // pred_check
        %p1806 = pneg %p348
      $region86: #{geminn_forward.1} parent=83 // pred_check_branch
        %1808 = sbr.rel (%p1806) target = $region88
      $region87: #{geminn_forward.1} parent=83 // pred_region
        %p1809 = scmp.lt.s32.totalorder %s26, 1
        %s1810 = scalar_select %p1809, %s26, 1
        %s1811 = smul.addr %s1810, 2
        %s1812 = smul.addr %s1811, 8
        %s1813 = scalar_lea.vmem %s14, %s1812
      $region88: #{geminn_forward.1} parent=83 // pred_fallthru
        _
    $region84: #{geminn_forward.1} parent=5 // pred_fallthru
      _
  $region6: #{geminn_forward.1} parent=0 // loop_footer
    %s24 = sadd.s32 1, %s20
  $region7: #{geminn_forward.1} parent=0 // loop_footer_branch
    %19 = sbr.rel target = $region3
  $region8: #{geminn_forward.1} parent=0 // loop_exit
    _

</llo_original>
